<compile_context>
chip_gen: v5e
topology: v5e:2x2
jax: 0.10.0
libtpu: 0.0.40
codegen_flags: <defaults>
</compile_context>

<pallas_src>
import math

import jax
import jax.numpy as jnp
from jax import lax
from jax.experimental import pallas as pl
from jax.experimental.pallas import tpu as pltpu


def lstm_decoder_kernel(x_ref, wih0_ref, whh0_ref, b0_ref,
                        w1_ref, b1_ref, wlin_ref, blin_ref,
                        out_ref, hn_ref, cn_ref,
                        xproj_ref, h1seq_ref):
    S = x_ref.shape[0]
    H = whh0_ref.shape[0]

    # Hoist weight loads out of the recurrence loop.
    whh0 = whh0_ref[...]
    w1 = w1_ref[...]          # pre-stacked [wih1; whh1] : (2H, 4H)
    b1 = b1_ref[...]

    # Hoisted layer-0 input projection (b0 folded in) for ALL timesteps:
    # one (S, I) @ (I, 4H) matmul instead of S degenerate (1, I) matmuls.
    xproj_ref[...] = (jnp.dot(x_ref[...], wih0_ref[...],
                              preferred_element_type=jnp.float32)
                      + b0_ref[...])

    def gates(g):
        # Two full-vreg transcendentals instead of four quarter-vreg ones.
        s = jax.nn.sigmoid(g)
        th = jnp.tanh(g)
        return s[:, 0:H], s[:, H:2 * H], th[:, 2 * H:3 * H], s[:, 3 * H:4 * H]

    def step(t, carry):
        h0, c0, h1, c1 = carry

        # layer 0: only the h-dependent matmul remains on the serial chain.
        g0 = (jnp.dot(h0, whh0, preferred_element_type=jnp.float32)
              + xproj_ref[pl.ds(t, 1), :])
        i0, f0, gg0, o0 = gates(g0)
        c0 = f0 * c0 + i0 * gg0
        h0 = o0 * jnp.tanh(c0)

        # layer 1: single fused (1, 2H) @ (2H, 4H) matmul.
        xh = jnp.concatenate([h0, h1], axis=1)
        g1 = jnp.dot(xh, w1, preferred_element_type=jnp.float32) + b1
        i1, f1, gg1, o1 = gates(g1)
        c1 = f1 * c1 + i1 * gg1
        h1 = o1 * jnp.tanh(c1)

        # Stash h1 for the hoisted Linear head (no per-step masked store to out).
        h1seq_ref[pl.ds(t, 1), :] = h1
        return (h0, c0, h1, c1)

    zeros = jnp.zeros((1, H), jnp.float32)
    h0, c0, h1, c1 = lax.fori_loop(0, S, step, (zeros, zeros, zeros, zeros),
                                   unroll=True)

    # Hoisted Linear head: one (S, H) @ (H, I) matmul + bias, one store.
    out_ref[...] = (jnp.dot(h1seq_ref[...], wlin_ref[...],
                            preferred_element_type=jnp.float32)
                    + blin_ref[...])

    hn_ref[0:1, :] = h0
    hn_ref[1:2, :] = h1
    cn_ref[0:1, :] = c0
    cn_ref[1:2, :] = c1


def lstm_decoder_forward(x, params):
    S, I = x.shape
    H = params["whh0"].shape[0]
    L = 2
    # Stack layer-1 weights once (outside the kernel): (2H, 4H).
    w1 = jnp.concatenate([params["wih1"], params["whh1"]], axis=0)

    vmem = pl.BlockSpec(memory_space=pltpu.MemorySpace.VMEM)
    out, hn, cn = pl.pallas_call(
        lstm_decoder_kernel,
        out_shape=(jax.ShapeDtypeStruct((S, I), jnp.float32),
                   jax.ShapeDtypeStruct((L, H), jnp.float32),
                   jax.ShapeDtypeStruct((L, H), jnp.float32)),
        in_specs=[vmem] * 8,
        out_specs=(vmem, vmem, vmem),
        scratch_shapes=[pltpu.VMEM((S, 4 * H), jnp.float32),   # hoisted x-proj
                        pltpu.VMEM((S, H), jnp.float32)],      # per-step h1
    )(x, params["wih0"], params["whh0"], params["b0"],
      w1, params["b1"],
      params["wlin"], params["blin"])
    return out, (hn, cn)


def init_params(key, input_size, hidden_size):
    """Deterministic synthetic init (PyTorch-style uniform(-1/sqrt(H), 1/sqrt(H)))."""
    bound = 1.0 / math.sqrt(hidden_size)
    keys = jax.random.split(key, 10)

    def u(k_, shape):
        return jax.random.uniform(k_, shape, jnp.float32, -bound, bound)

    # PyTorch layouts, then transpose for the kernel.
    w_ih0 = u(keys[0], (4 * hidden_size, input_size))
    w_hh0 = u(keys[1], (4 * hidden_size, hidden_size))
    b_ih0 = u(keys[2], (4 * hidden_size,))
    b_hh0 = u(keys[3], (4 * hidden_size,))
    w_ih1 = u(keys[4], (4 * hidden_size, hidden_size))
    w_hh1 = u(keys[5], (4 * hidden_size, hidden_size))
    b_ih1 = u(keys[6], (4 * hidden_size,))
    b_hh1 = u(keys[7], (4 * hidden_size,))
    w_lin = u(keys[8], (input_size, hidden_size))
    b_lin = u(keys[9], (input_size,))

    return dict(
        wih0=w_ih0.T, whh0=w_hh0.T, b0=(b_ih0 + b_hh0)[None, :],
        wih1=w_ih1.T, whh1=w_hh1.T, b1=(b_ih1 + b_hh1)[None, :],
        wlin=w_lin.T, blin=b_lin[None, :],
    )


def reference_forward(x, params):
    """Pure-JAX reference of the same forward (for correctness check)."""
    H = params["whh0"].shape[0]

    def cell(x_t, h, c, wih, whh, b):
        g = x_t @ wih + h @ whh + b
        i = jax.nn.sigmoid(g[:, 0:H])
        f = jax.nn.sigmoid(g[:, H:2 * H])
        gg = jnp.tanh(g[:, 2 * H:3 * H])
        o = jax.nn.sigmoid(g[:, 3 * H:4 * H])
        c = f * c + i * gg
        h = o * jnp.tanh(c)
        return h, c

    def step(carry, x_row):
        h0, c0, h1, c1 = carry
        x_t = x_row[None, :]
        h0, c0 = cell(x_t, h0, c0, params["wih0"], params["whh0"], params["b0"])
        h1, c1 = cell(h0, h1, c1, params["wih1"], params["whh1"], params["b1"])
        y = h1 @ params["wlin"] + params["blin"]
        return (h0, c0, h1, c1), y[0]

    z = jnp.zeros((1, H), jnp.float32)
    (h0, c0, h1, c1), ys = lax.scan(step, (z, z, z, z), x)
    hn = jnp.concatenate([h0, h1], axis=0)
    cn = jnp.concatenate([c0, c1], axis=0)
    return ys, (hn, cn)


if __name__ == "__main__":
    input_size = 4
    hidden_size = 32
    seq_len = 8

    root = jax.random.PRNGKey(0)
    k_x, k_p = jax.random.split(root)
    x = jax.random.normal(k_x, (seq_len, input_size), dtype=jnp.float32)
    params = init_params(k_p, input_size, hidden_size)

    out, (hn, cn) = lstm_decoder_forward(x, params)
    jax.block_until_ready((out, hn, cn))

    ref_out, (ref_hn, ref_cn) = reference_forward(x, params)
    assert out.shape == (seq_len, input_size)
    assert hn.shape == (2, hidden_size) and cn.shape == (2, hidden_size)
    assert jnp.allclose(out, ref_out, rtol=1e-4, atol=1e-4)
    assert jnp.allclose(hn, ref_hn, rtol=1e-4, atol=1e-4)
    assert jnp.allclose(cn, ref_cn, rtol=1e-4, atol=1e-4)

    print("KERNEL_OK")
</pallas_src>

<mosaic_0001>
module attributes {stable_mosaic.version = 11 : i64} {
  func.func @lstm_decoder_kernel(%arg0: memref<8x4xf32, #tpu.memory_space<vmem>>, %arg1: memref<4x128xf32, #tpu.memory_space<vmem>>, %arg2: memref<32x128xf32, #tpu.memory_space<vmem>>, %arg3: memref<1x128xf32, #tpu.memory_space<vmem>>, %arg4: memref<64x128xf32, #tpu.memory_space<vmem>>, %arg5: memref<1x128xf32, #tpu.memory_space<vmem>>, %arg6: memref<32x4xf32, #tpu.memory_space<vmem>>, %arg7: memref<1x4xf32, #tpu.memory_space<vmem>>, %arg8: memref<8x4xf32, #tpu.memory_space<vmem>>, %arg9: memref<2x32xf32, #tpu.memory_space<vmem>>, %arg10: memref<2x32xf32, #tpu.memory_space<vmem>>, %arg11: memref<8x128xf32, #tpu.memory_space<vmem>>, %arg12: memref<8x32xf32, #tpu.memory_space<vmem>>) attributes {dimension_semantics = [], scalar_prefetch = 0 : i64, scratch_operands = 2 : i64, tpu.core_type = #tpu.core_type<tc>} {
    %c0 = arith.constant 0 : index
    %c0_0 = arith.constant 0 : index
    %0 = vector.load %arg2[%c0, %c0_0] : memref<32x128xf32, #tpu.memory_space<vmem>>, vector<32x128xf32>
    %c0_1 = arith.constant 0 : index
    %c0_2 = arith.constant 0 : index
    %1 = vector.load %arg4[%c0_1, %c0_2] : memref<64x128xf32, #tpu.memory_space<vmem>>, vector<64x128xf32>
    %c0_3 = arith.constant 0 : index
    %c0_4 = arith.constant 0 : index
    %2 = vector.load %arg5[%c0_3, %c0_4] : memref<1x128xf32, #tpu.memory_space<vmem>>, vector<1x128xf32>
    %c0_5 = arith.constant 0 : index
    %c0_6 = arith.constant 0 : index
    %3 = vector.load %arg0[%c0_5, %c0_6] : memref<8x4xf32, #tpu.memory_space<vmem>>, vector<8x4xf32>
    %c0_7 = arith.constant 0 : index
    %c0_8 = arith.constant 0 : index
    %4 = vector.load %arg1[%c0_7, %c0_8] : memref<4x128xf32, #tpu.memory_space<vmem>>, vector<4x128xf32>
    %cst = arith.constant dense<0.000000e+00> : vector<8x128xf32>
    %5 = tpu.matmul %3, %4, %cst {dimension_numbers = #tpu.dot_dimension_numbers<[1], [0], [0], [1], [0, 0, 1, 1], [], []>} : vector<8x4xf32>, vector<4x128xf32>, vector<8x128xf32> -> vector<8x128xf32>
    %c0_9 = arith.constant 0 : index
    %c0_10 = arith.constant 0 : index
    %6 = vector.load %arg3[%c0_9, %c0_10] : memref<1x128xf32, #tpu.memory_space<vmem>>, vector<1x128xf32>
    %7 = vector.broadcast %6 : vector<1x128xf32> to vector<8x128xf32>
    %8 = arith.addf %5, %7 : vector<8x128xf32>
    %c0_11 = arith.constant 0 : index
    %c0_12 = arith.constant 0 : index
    %9 = vector.load %arg11[%c0_11, %c0_12] : memref<8x128xf32, #tpu.memory_space<vmem>>, vector<8x128xf32>
    tpu.vector_store %arg11[%c0_11, %c0_12], %8 {strides = array<i32>} : memref<8x128xf32, #tpu.memory_space<vmem>>, vector<8x128xf32>,
    %cst_13 = arith.constant 0.000000e+00 : f32
    %10 = vector.broadcast %cst_13 : f32 to vector<1x32xf32>
    %c0_i32 = arith.constant 0 : i32
    %cst_14 = arith.constant dense<0.000000e+00> : vector<1x128xf32>
    %11 = tpu.matmul %10, %0, %cst_14 {dimension_numbers = #tpu.dot_dimension_numbers<[1], [0], [0], [1], [0, 0, 1, 1], [], []>} : vector<1x32xf32>, vector<32x128xf32>, vector<1x128xf32> -> vector<1x128xf32>
    %12 = arith.index_cast %c0_i32 : i32 to index
    %c0_15 = arith.constant 0 : index
    %13 = vector.load %arg11[%12, %c0_15] : memref<8x128xf32, #tpu.memory_space<vmem>>, vector<1x128xf32>
    %14 = arith.addf %11, %13 : vector<1x128xf32>
    %15 = arith.negf %14 : vector<1x128xf32>
    %16 = math.exp %15 : vector<1x128xf32>
    %cst_16 = arith.constant 1.000000e+00 : f32
    %17 = vector.broadcast %cst_16 : f32 to vector<1x128xf32>
    %18 = arith.addf %17, %16 : vector<1x128xf32>
    %19 = arith.divf %17, %18 : vector<1x128xf32>
    %20 = math.tanh %14 : vector<1x128xf32>
    %21 = vector.extract_strided_slice %19 {offsets = [0, 0], sizes = [1, 32], strides = [1, 1]} : vector<1x128xf32> to vector<1x32xf32>
    %22 = vector.extract_strided_slice %19 {offsets = [0, 32], sizes = [1, 32], strides = [1, 1]} : vector<1x128xf32> to vector<1x32xf32>
    %23 = vector.extract_strided_slice %20 {offsets = [0, 64], sizes = [1, 32], strides = [1, 1]} : vector<1x128xf32> to vector<1x32xf32>
    %24 = vector.extract_strided_slice %19 {offsets = [0, 96], sizes = [1, 32], strides = [1, 1]} : vector<1x128xf32> to vector<1x32xf32>
    %25 = arith.mulf %22, %10 : vector<1x32xf32>
    %26 = arith.mulf %21, %23 : vector<1x32xf32>
    %27 = arith.addf %25, %26 : vector<1x32xf32>
    %28 = math.tanh %27 : vector<1x32xf32>
    %29 = arith.mulf %24, %28 : vector<1x32xf32>
    %30 = tpu.concatenate %29, %10 in 1 : vector<1x32xf32>, vector<1x32xf32> -> vector<1x64xf32>
    %cst_17 = arith.constant dense<0.000000e+00> : vector<1x128xf32>
    %31 = tpu.matmul %30, %1, %cst_17 {dimension_numbers = #tpu.dot_dimension_numbers<[1], [0], [0], [1], [0, 0, 1, 1], [], []>} : vector<1x64xf32>, vector<64x128xf32>, vector<1x128xf32> -> vector<1x128xf32>
    %32 = arith.addf %31, %2 : vector<1x128xf32>
    %33 = arith.negf %32 : vector<1x128xf32>
    %34 = math.exp %33 : vector<1x128xf32>
    %cst_18 = arith.constant 1.000000e+00 : f32
    %35 = vector.broadcast %cst_18 : f32 to vector<1x128xf32>
    %36 = arith.addf %35, %34 : vector<1x128xf32>
    %37 = arith.divf %35, %36 : vector<1x128xf32>
    %38 = math.tanh %32 : vector<1x128xf32>
    %39 = vector.extract_strided_slice %37 {offsets = [0, 0], sizes = [1, 32], strides = [1, 1]} : vector<1x128xf32> to vector<1x32xf32>
    %40 = vector.extract_strided_slice %37 {offsets = [0, 32], sizes = [1, 32], strides = [1, 1]} : vector<1x128xf32> to vector<1x32xf32>
    %41 = vector.extract_strided_slice %38 {offsets = [0, 64], sizes = [1, 32], strides = [1, 1]} : vector<1x128xf32> to vector<1x32xf32>
    %42 = vector.extract_strided_slice %37 {offsets = [0, 96], sizes = [1, 32], strides = [1, 1]} : vector<1x128xf32> to vector<1x32xf32>
    %43 = arith.mulf %40, %10 : vector<1x32xf32>
    %44 = arith.mulf %39, %41 : vector<1x32xf32>
    %45 = arith.addf %43, %44 : vector<1x32xf32>
    %46 = math.tanh %45 : vector<1x32xf32>
    %47 = arith.mulf %42, %46 : vector<1x32xf32>
    %48 = arith.index_cast %c0_i32 : i32 to index
    %c0_19 = arith.constant 0 : index
    %49 = vector.load %arg12[%48, %c0_19] : memref<8x32xf32, #tpu.memory_space<vmem>>, vector<1x32xf32>
    tpu.vector_store %arg12[%48, %c0_19], %47 {strides = array<i32>} : memref<8x32xf32, #tpu.memory_space<vmem>>, vector<1x32xf32>,
    %c1_i32 = arith.constant 1 : i32
    %cst_20 = arith.constant dense<0.000000e+00> : vector<1x128xf32>
    %50 = tpu.matmul %29, %0, %cst_20 {dimension_numbers = #tpu.dot_dimension_numbers<[1], [0], [0], [1], [0, 0, 1, 1], [], []>} : vector<1x32xf32>, vector<32x128xf32>, vector<1x128xf32> -> vector<1x128xf32>
    %51 = arith.index_cast %c1_i32 : i32 to index
    %c0_21 = arith.constant 0 : index
    %52 = vector.load %arg11[%51, %c0_21] : memref<8x128xf32, #tpu.memory_space<vmem>>, vector<1x128xf32>
    %53 = arith.addf %50, %52 : vector<1x128xf32>
    %54 = arith.negf %53 : vector<1x128xf32>
    %55 = math.exp %54 : vector<1x128xf32>
    %cst_22 = arith.constant 1.000000e+00 : f32
    %56 = vector.broadcast %cst_22 : f32 to vector<1x128xf32>
    %57 = arith.addf %56, %55 : vector<1x128xf32>
    %58 = arith.divf %56, %57 : vector<1x128xf32>
    %59 = math.tanh %53 : vector<1x128xf32>
    %60 = vector.extract_strided_slice %58 {offsets = [0, 0], sizes = [1, 32], strides = [1, 1]} : vector<1x128xf32> to vector<1x32xf32>
    %61 = vector.extract_strided_slice %58 {offsets = [0, 32], sizes = [1, 32], strides = [1, 1]} : vector<1x128xf32> to vector<1x32xf32>
    %62 = vector.extract_strided_slice %59 {offsets = [0, 64], sizes = [1, 32], strides = [1, 1]} : vector<1x128xf32> to vector<1x32xf32>
    %63 = vector.extract_strided_slice %58 {offsets = [0, 96], sizes = [1, 32], strides = [1, 1]} : vector<1x128xf32> to vector<1x32xf32>
    %64 = arith.mulf %61, %27 : vector<1x32xf32>
    %65 = arith.mulf %60, %62 : vector<1x32xf32>
    %66 = arith.addf %64, %65 : vector<1x32xf32>
    %67 = math.tanh %66 : vector<1x32xf32>
    %68 = arith.mulf %63, %67 : vector<1x32xf32>
    %69 = tpu.concatenate %68, %47 in 1 : vector<1x32xf32>, vector<1x32xf32> -> vector<1x64xf32>
    %cst_23 = arith.constant dense<0.000000e+00> : vector<1x128xf32>
    %70 = tpu.matmul %69, %1, %cst_23 {dimension_numbers = #tpu.dot_dimension_numbers<[1], [0], [0], [1], [0, 0, 1, 1], [], []>} : vector<1x64xf32>, vector<64x128xf32>, vector<1x128xf32> -> vector<1x128xf32>
    %71 = arith.addf %70, %2 : vector<1x128xf32>
    %72 = arith.negf %71 : vector<1x128xf32>
    %73 = math.exp %72 : vector<1x128xf32>
    %cst_24 = arith.constant 1.000000e+00 : f32
    %74 = vector.broadcast %cst_24 : f32 to vector<1x128xf32>
    %75 = arith.addf %74, %73 : vector<1x128xf32>
    %76 = arith.divf %74, %75 : vector<1x128xf32>
    %77 = math.tanh %71 : vector<1x128xf32>
    %78 = vector.extract_strided_slice %76 {offsets = [0, 0], sizes = [1, 32], strides = [1, 1]} : vector<1x128xf32> to vector<1x32xf32>
    %79 = vector.extract_strided_slice %76 {offsets = [0, 32], sizes = [1, 32], strides = [1, 1]} : vector<1x128xf32> to vector<1x32xf32>
    %80 = vector.extract_strided_slice %77 {offsets = [0, 64], sizes = [1, 32], strides = [1, 1]} : vector<1x128xf32> to vector<1x32xf32>
    %81 = vector.extract_strided_slice %76 {offsets = [0, 96], sizes = [1, 32], strides = [1, 1]} : vector<1x128xf32> to vector<1x32xf32>
    %82 = arith.mulf %79, %45 : vector<1x32xf32>
    %83 = arith.mulf %78, %80 : vector<1x32xf32>
    %84 = arith.addf %82, %83 : vector<1x32xf32>
    %85 = math.tanh %84 : vector<1x32xf32>
    %86 = arith.mulf %81, %85 : vector<1x32xf32>
    %87 = arith.index_cast %c1_i32 : i32 to index
    %c0_25 = arith.constant 0 : index
    %88 = vector.load %arg12[%87, %c0_25] : memref<8x32xf32, #tpu.memory_space<vmem>>, vector<1x32xf32>
    tpu.vector_store %arg12[%87, %c0_25], %86 {strides = array<i32>} : memref<8x32xf32, #tpu.memory_space<vmem>>, vector<1x32xf32>,
    %c2_i32 = arith.constant 2 : i32
    %cst_26 = arith.constant dense<0.000000e+00> : vector<1x128xf32>
    %89 = tpu.matmul %68, %0, %cst_26 {dimension_numbers = #tpu.dot_dimension_numbers<[1], [0], [0], [1], [0, 0, 1, 1], [], []>} : vector<1x32xf32>, vector<32x128xf32>, vector<1x128xf32> -> vector<1x128xf32>
    %90 = arith.index_cast %c2_i32 : i32 to index
    %c0_27 = arith.constant 0 : index
    %91 = vector.load %arg11[%90, %c0_27] : memref<8x128xf32, #tpu.memory_space<vmem>>, vector<1x128xf32>
    %92 = arith.addf %89, %91 : vector<1x128xf32>
    %93 = arith.negf %92 : vector<1x128xf32>
    %94 = math.exp %93 : vector<1x128xf32>
    %cst_28 = arith.constant 1.000000e+00 : f32
    %95 = vector.broadcast %cst_28 : f32 to vector<1x128xf32>
    %96 = arith.addf %95, %94 : vector<1x128xf32>
    %97 = arith.divf %95, %96 : vector<1x128xf32>
    %98 = math.tanh %92 : vector<1x128xf32>
    %99 = vector.extract_strided_slice %97 {offsets = [0, 0], sizes = [1, 32], strides = [1, 1]} : vector<1x128xf32> to vector<1x32xf32>
    %100 = vector.extract_strided_slice %97 {offsets = [0, 32], sizes = [1, 32], strides = [1, 1]} : vector<1x128xf32> to vector<1x32xf32>
    %101 = vector.extract_strided_slice %98 {offsets = [0, 64], sizes = [1, 32], strides = [1, 1]} : vector<1x128xf32> to vector<1x32xf32>
    %102 = vector.extract_strided_slice %97 {offsets = [0, 96], sizes = [1, 32], strides = [1, 1]} : vector<1x128xf32> to vector<1x32xf32>
    %103 = arith.mulf %100, %66 : vector<1x32xf32>
    %104 = arith.mulf %99, %101 : vector<1x32xf32>
    %105 = arith.addf %103, %104 : vector<1x32xf32>
    %106 = math.tanh %105 : vector<1x32xf32>
    %107 = arith.mulf %102, %106 : vector<1x32xf32>
    %108 = tpu.concatenate %107, %86 in 1 : vector<1x32xf32>, vector<1x32xf32> -> vector<1x64xf32>
    %cst_29 = arith.constant dense<0.000000e+00> : vector<1x128xf32>
    %109 = tpu.matmul %108, %1, %cst_29 {dimension_numbers = #tpu.dot_dimension_numbers<[1], [0], [0], [1], [0, 0, 1, 1], [], []>} : vector<1x64xf32>, vector<64x128xf32>, vector<1x128xf32> -> vector<1x128xf32>
    %110 = arith.addf %109, %2 : vector<1x128xf32>
    %111 = arith.negf %110 : vector<1x128xf32>
    %112 = math.exp %111 : vector<1x128xf32>
    %cst_30 = arith.constant 1.000000e+00 : f32
    %113 = vector.broadcast %cst_30 : f32 to vector<1x128xf32>
    %114 = arith.addf %113, %112 : vector<1x128xf32>
    %115 = arith.divf %113, %114 : vector<1x128xf32>
    %116 = math.tanh %110 : vector<1x128xf32>
    %117 = vector.extract_strided_slice %115 {offsets = [0, 0], sizes = [1, 32], strides = [1, 1]} : vector<1x128xf32> to vector<1x32xf32>
    %118 = vector.extract_strided_slice %115 {offsets = [0, 32], sizes = [1, 32], strides = [1, 1]} : vector<1x128xf32> to vector<1x32xf32>
    %119 = vector.extract_strided_slice %116 {offsets = [0, 64], sizes = [1, 32], strides = [1, 1]} : vector<1x128xf32> to vector<1x32xf32>
    %120 = vector.extract_strided_slice %115 {offsets = [0, 96], sizes = [1, 32], strides = [1, 1]} : vector<1x128xf32> to vector<1x32xf32>
    %121 = arith.mulf %118, %84 : vector<1x32xf32>
    %122 = arith.mulf %117, %119 : vector<1x32xf32>
    %123 = arith.addf %121, %122 : vector<1x32xf32>
    %124 = math.tanh %123 : vector<1x32xf32>
    %125 = arith.mulf %120, %124 : vector<1x32xf32>
    %126 = arith.index_cast %c2_i32 : i32 to index
    %c0_31 = arith.constant 0 : index
    %127 = vector.load %arg12[%126, %c0_31] : memref<8x32xf32, #tpu.memory_space<vmem>>, vector<1x32xf32>
    tpu.vector_store %arg12[%126, %c0_31], %125 {strides = array<i32>} : memref<8x32xf32, #tpu.memory_space<vmem>>, vector<1x32xf32>,
    %c3_i32 = arith.constant 3 : i32
    %cst_32 = arith.constant dense<0.000000e+00> : vector<1x128xf32>
    %128 = tpu.matmul %107, %0, %cst_32 {dimension_numbers = #tpu.dot_dimension_numbers<[1], [0], [0], [1], [0, 0, 1, 1], [], []>} : vector<1x32xf32>, vector<32x128xf32>, vector<1x128xf32> -> vector<1x128xf32>
    %129 = arith.index_cast %c3_i32 : i32 to index
    %c0_33 = arith.constant 0 : index
    %130 = vector.load %arg11[%129, %c0_33] : memref<8x128xf32, #tpu.memory_space<vmem>>, vector<1x128xf32>
    %131 = arith.addf %128, %130 : vector<1x128xf32>
    %132 = arith.negf %131 : vector<1x128xf32>
    %133 = math.exp %132 : vector<1x128xf32>
    %cst_34 = arith.constant 1.000000e+00 : f32
    %134 = vector.broadcast %cst_34 : f32 to vector<1x128xf32>
    %135 = arith.addf %134, %133 : vector<1x128xf32>
    %136 = arith.divf %134, %135 : vector<1x128xf32>
    %137 = math.tanh %131 : vector<1x128xf32>
    %138 = vector.extract_strided_slice %136 {offsets = [0, 0], sizes = [1, 32], strides = [1, 1]} : vector<1x128xf32> to vector<1x32xf32>
    %139 = vector.extract_strided_slice %136 {offsets = [0, 32], sizes = [1, 32], strides = [1, 1]} : vector<1x128xf32> to vector<1x32xf32>
    %140 = vector.extract_strided_slice %137 {offsets = [0, 64], sizes = [1, 32], strides = [1, 1]} : vector<1x128xf32> to vector<1x32xf32>
    %141 = vector.extract_strided_slice %136 {offsets = [0, 96], sizes = [1, 32], strides = [1, 1]} : vector<1x128xf32> to vector<1x32xf32>
    %142 = arith.mulf %139, %105 : vector<1x32xf32>
    %143 = arith.mulf %138, %140 : vector<1x32xf32>
    %144 = arith.addf %142, %143 : vector<1x32xf32>
    %145 = math.tanh %144 : vector<1x32xf32>
    %146 = arith.mulf %141, %145 : vector<1x32xf32>
    %147 = tpu.concatenate %146, %125 in 1 : vector<1x32xf32>, vector<1x32xf32> -> vector<1x64xf32>
    %cst_35 = arith.constant dense<0.000000e+00> : vector<1x128xf32>
    %148 = tpu.matmul %147, %1, %cst_35 {dimension_numbers = #tpu.dot_dimension_numbers<[1], [0], [0], [1], [0, 0, 1, 1], [], []>} : vector<1x64xf32>, vector<64x128xf32>, vector<1x128xf32> -> vector<1x128xf32>
    %149 = arith.addf %148, %2 : vector<1x128xf32>
    %150 = arith.negf %149 : vector<1x128xf32>
    %151 = math.exp %150 : vector<1x128xf32>
    %cst_36 = arith.constant 1.000000e+00 : f32
    %152 = vector.broadcast %cst_36 : f32 to vector<1x128xf32>
    %153 = arith.addf %152, %151 : vector<1x128xf32>
    %154 = arith.divf %152, %153 : vector<1x128xf32>
    %155 = math.tanh %149 : vector<1x128xf32>
    %156 = vector.extract_strided_slice %154 {offsets = [0, 0], sizes = [1, 32], strides = [1, 1]} : vector<1x128xf32> to vector<1x32xf32>
    %157 = vector.extract_strided_slice %154 {offsets = [0, 32], sizes = [1, 32], strides = [1, 1]} : vector<1x128xf32> to vector<1x32xf32>
    %158 = vector.extract_strided_slice %155 {offsets = [0, 64], sizes = [1, 32], strides = [1, 1]} : vector<1x128xf32> to vector<1x32xf32>
    %159 = vector.extract_strided_slice %154 {offsets = [0, 96], sizes = [1, 32], strides = [1, 1]} : vector<1x128xf32> to vector<1x32xf32>
    %160 = arith.mulf %157, %123 : vector<1x32xf32>
    %161 = arith.mulf %156, %158 : vector<1x32xf32>
    %162 = arith.addf %160, %161 : vector<1x32xf32>
    %163 = math.tanh %162 : vector<1x32xf32>
    %164 = arith.mulf %159, %163 : vector<1x32xf32>
    %165 = arith.index_cast %c3_i32 : i32 to index
    %c0_37 = arith.constant 0 : index
    %166 = vector.load %arg12[%165, %c0_37] : memref<8x32xf32, #tpu.memory_space<vmem>>, vector<1x32xf32>
    tpu.vector_store %arg12[%165, %c0_37], %164 {strides = array<i32>} : memref<8x32xf32, #tpu.memory_space<vmem>>, vector<1x32xf32>,
    %c4_i32 = arith.constant 4 : i32
    %cst_38 = arith.constant dense<0.000000e+00> : vector<1x128xf32>
    %167 = tpu.matmul %146, %0, %cst_38 {dimension_numbers = #tpu.dot_dimension_numbers<[1], [0], [0], [1], [0, 0, 1, 1], [], []>} : vector<1x32xf32>, vector<32x128xf32>, vector<1x128xf32> -> vector<1x128xf32>
    %168 = arith.index_cast %c4_i32 : i32 to index
    %c0_39 = arith.constant 0 : index
    %169 = vector.load %arg11[%168, %c0_39] : memref<8x128xf32, #tpu.memory_space<vmem>>, vector<1x128xf32>
    %170 = arith.addf %167, %169 : vector<1x128xf32>
    %171 = arith.negf %170 : vector<1x128xf32>
    %172 = math.exp %171 : vector<1x128xf32>
    %cst_40 = arith.constant 1.000000e+00 : f32
    %173 = vector.broadcast %cst_40 : f32 to vector<1x128xf32>
    %174 = arith.addf %173, %172 : vector<1x128xf32>
    %175 = arith.divf %173, %174 : vector<1x128xf32>
    %176 = math.tanh %170 : vector<1x128xf32>
    %177 = vector.extract_strided_slice %175 {offsets = [0, 0], sizes = [1, 32], strides = [1, 1]} : vector<1x128xf32> to vector<1x32xf32>
    %178 = vector.extract_strided_slice %175 {offsets = [0, 32], sizes = [1, 32], strides = [1, 1]} : vector<1x128xf32> to vector<1x32xf32>
    %179 = vector.extract_strided_slice %176 {offsets = [0, 64], sizes = [1, 32], strides = [1, 1]} : vector<1x128xf32> to vector<1x32xf32>
    %180 = vector.extract_strided_slice %175 {offsets = [0, 96], sizes = [1, 32], strides = [1, 1]} : vector<1x128xf32> to vector<1x32xf32>
    %181 = arith.mulf %178, %144 : vector<1x32xf32>
    %182 = arith.mulf %177, %179 : vector<1x32xf32>
    %183 = arith.addf %181, %182 : vector<1x32xf32>
    %184 = math.tanh %183 : vector<1x32xf32>
    %185 = arith.mulf %180, %184 : vector<1x32xf32>
    %186 = tpu.concatenate %185, %164 in 1 : vector<1x32xf32>, vector<1x32xf32> -> vector<1x64xf32>
    %cst_41 = arith.constant dense<0.000000e+00> : vector<1x128xf32>
    %187 = tpu.matmul %186, %1, %cst_41 {dimension_numbers = #tpu.dot_dimension_numbers<[1], [0], [0], [1], [0, 0, 1, 1], [], []>} : vector<1x64xf32>, vector<64x128xf32>, vector<1x128xf32> -> vector<1x128xf32>
    %188 = arith.addf %187, %2 : vector<1x128xf32>
    %189 = arith.negf %188 : vector<1x128xf32>
    %190 = math.exp %189 : vector<1x128xf32>
    %cst_42 = arith.constant 1.000000e+00 : f32
    %191 = vector.broadcast %cst_42 : f32 to vector<1x128xf32>
    %192 = arith.addf %191, %190 : vector<1x128xf32>
    %193 = arith.divf %191, %192 : vector<1x128xf32>
    %194 = math.tanh %188 : vector<1x128xf32>
    %195 = vector.extract_strided_slice %193 {offsets = [0, 0], sizes = [1, 32], strides = [1, 1]} : vector<1x128xf32> to vector<1x32xf32>
    %196 = vector.extract_strided_slice %193 {offsets = [0, 32], sizes = [1, 32], strides = [1, 1]} : vector<1x128xf32> to vector<1x32xf32>
    %197 = vector.extract_strided_slice %194 {offsets = [0, 64], sizes = [1, 32], strides = [1, 1]} : vector<1x128xf32> to vector<1x32xf32>
    %198 = vector.extract_strided_slice %193 {offsets = [0, 96], sizes = [1, 32], strides = [1, 1]} : vector<1x128xf32> to vector<1x32xf32>
    %199 = arith.mulf %196, %162 : vector<1x32xf32>
    %200 = arith.mulf %195, %197 : vector<1x32xf32>
    %201 = arith.addf %199, %200 : vector<1x32xf32>
    %202 = math.tanh %201 : vector<1x32xf32>
    %203 = arith.mulf %198, %202 : vector<1x32xf32>
    %204 = arith.index_cast %c4_i32 : i32 to index
    %c0_43 = arith.constant 0 : index
    %205 = vector.load %arg12[%204, %c0_43] : memref<8x32xf32, #tpu.memory_space<vmem>>, vector<1x32xf32>
    tpu.vector_store %arg12[%204, %c0_43], %203 {strides = array<i32>} : memref<8x32xf32, #tpu.memory_space<vmem>>, vector<1x32xf32>,
    %c5_i32 = arith.constant 5 : i32
    %cst_44 = arith.constant dense<0.000000e+00> : vector<1x128xf32>
    %206 = tpu.matmul %185, %0, %cst_44 {dimension_numbers = #tpu.dot_dimension_numbers<[1], [0], [0], [1], [0, 0, 1, 1], [], []>} : vector<1x32xf32>, vector<32x128xf32>, vector<1x128xf32> -> vector<1x128xf32>
    %207 = arith.index_cast %c5_i32 : i32 to index
    %c0_45 = arith.constant 0 : index
    %208 = vector.load %arg11[%207, %c0_45] : memref<8x128xf32, #tpu.memory_space<vmem>>, vector<1x128xf32>
    %209 = arith.addf %206, %208 : vector<1x128xf32>
    %210 = arith.negf %209 : vector<1x128xf32>
    %211 = math.exp %210 : vector<1x128xf32>
    %cst_46 = arith.constant 1.000000e+00 : f32
    %212 = vector.broadcast %cst_46 : f32 to vector<1x128xf32>
    %213 = arith.addf %212, %211 : vector<1x128xf32>
    %214 = arith.divf %212, %213 : vector<1x128xf32>
    %215 = math.tanh %209 : vector<1x128xf32>
    %216 = vector.extract_strided_slice %214 {offsets = [0, 0], sizes = [1, 32], strides = [1, 1]} : vector<1x128xf32> to vector<1x32xf32>
    %217 = vector.extract_strided_slice %214 {offsets = [0, 32], sizes = [1, 32], strides = [1, 1]} : vector<1x128xf32> to vector<1x32xf32>
    %218 = vector.extract_strided_slice %215 {offsets = [0, 64], sizes = [1, 32], strides = [1, 1]} : vector<1x128xf32> to vector<1x32xf32>
    %219 = vector.extract_strided_slice %214 {offsets = [0, 96], sizes = [1, 32], strides = [1, 1]} : vector<1x128xf32> to vector<1x32xf32>
    %220 = arith.mulf %217, %183 : vector<1x32xf32>
    %221 = arith.mulf %216, %218 : vector<1x32xf32>
    %222 = arith.addf %220, %221 : vector<1x32xf32>
    %223 = math.tanh %222 : vector<1x32xf32>
    %224 = arith.mulf %219, %223 : vector<1x32xf32>
    %225 = tpu.concatenate %224, %203 in 1 : vector<1x32xf32>, vector<1x32xf32> -> vector<1x64xf32>
    %cst_47 = arith.constant dense<0.000000e+00> : vector<1x128xf32>
    %226 = tpu.matmul %225, %1, %cst_47 {dimension_numbers = #tpu.dot_dimension_numbers<[1], [0], [0], [1], [0, 0, 1, 1], [], []>} : vector<1x64xf32>, vector<64x128xf32>, vector<1x128xf32> -> vector<1x128xf32>
    %227 = arith.addf %226, %2 : vector<1x128xf32>
    %228 = arith.negf %227 : vector<1x128xf32>
    %229 = math.exp %228 : vector<1x128xf32>
    %cst_48 = arith.constant 1.000000e+00 : f32
    %230 = vector.broadcast %cst_48 : f32 to vector<1x128xf32>
    %231 = arith.addf %230, %229 : vector<1x128xf32>
    %232 = arith.divf %230, %231 : vector<1x128xf32>
    %233 = math.tanh %227 : vector<1x128xf32>
    %234 = vector.extract_strided_slice %232 {offsets = [0, 0], sizes = [1, 32], strides = [1, 1]} : vector<1x128xf32> to vector<1x32xf32>
    %235 = vector.extract_strided_slice %232 {offsets = [0, 32], sizes = [1, 32], strides = [1, 1]} : vector<1x128xf32> to vector<1x32xf32>
    %236 = vector.extract_strided_slice %233 {offsets = [0, 64], sizes = [1, 32], strides = [1, 1]} : vector<1x128xf32> to vector<1x32xf32>
    %237 = vector.extract_strided_slice %232 {offsets = [0, 96], sizes = [1, 32], strides = [1, 1]} : vector<1x128xf32> to vector<1x32xf32>
    %238 = arith.mulf %235, %201 : vector<1x32xf32>
    %239 = arith.mulf %234, %236 : vector<1x32xf32>
    %240 = arith.addf %238, %239 : vector<1x32xf32>
    %241 = math.tanh %240 : vector<1x32xf32>
    %242 = arith.mulf %237, %241 : vector<1x32xf32>
    %243 = arith.index_cast %c5_i32 : i32 to index
    %c0_49 = arith.constant 0 : index
    %244 = vector.load %arg12[%243, %c0_49] : memref<8x32xf32, #tpu.memory_space<vmem>>, vector<1x32xf32>
    tpu.vector_store %arg12[%243, %c0_49], %242 {strides = array<i32>} : memref<8x32xf32, #tpu.memory_space<vmem>>, vector<1x32xf32>,
    %c6_i32 = arith.constant 6 : i32
    %cst_50 = arith.constant dense<0.000000e+00> : vector<1x128xf32>
    %245 = tpu.matmul %224, %0, %cst_50 {dimension_numbers = #tpu.dot_dimension_numbers<[1], [0], [0], [1], [0, 0, 1, 1], [], []>} : vector<1x32xf32>, vector<32x128xf32>, vector<1x128xf32> -> vector<1x128xf32>
    %246 = arith.index_cast %c6_i32 : i32 to index
    %c0_51 = arith.constant 0 : index
    %247 = vector.load %arg11[%246, %c0_51] : memref<8x128xf32, #tpu.memory_space<vmem>>, vector<1x128xf32>
    %248 = arith.addf %245, %247 : vector<1x128xf32>
    %249 = arith.negf %248 : vector<1x128xf32>
    %250 = math.exp %249 : vector<1x128xf32>
    %cst_52 = arith.constant 1.000000e+00 : f32
    %251 = vector.broadcast %cst_52 : f32 to vector<1x128xf32>
    %252 = arith.addf %251, %250 : vector<1x128xf32>
    %253 = arith.divf %251, %252 : vector<1x128xf32>
    %254 = math.tanh %248 : vector<1x128xf32>
    %255 = vector.extract_strided_slice %253 {offsets = [0, 0], sizes = [1, 32], strides = [1, 1]} : vector<1x128xf32> to vector<1x32xf32>
    %256 = vector.extract_strided_slice %253 {offsets = [0, 32], sizes = [1, 32], strides = [1, 1]} : vector<1x128xf32> to vector<1x32xf32>
    %257 = vector.extract_strided_slice %254 {offsets = [0, 64], sizes = [1, 32], strides = [1, 1]} : vector<1x128xf32> to vector<1x32xf32>
    %258 = vector.extract_strided_slice %253 {offsets = [0, 96], sizes = [1, 32], strides = [1, 1]} : vector<1x128xf32> to vector<1x32xf32>
    %259 = arith.mulf %256, %222 : vector<1x32xf32>
    %260 = arith.mulf %255, %257 : vector<1x32xf32>
    %261 = arith.addf %259, %260 : vector<1x32xf32>
    %262 = math.tanh %261 : vector<1x32xf32>
    %263 = arith.mulf %258, %262 : vector<1x32xf32>
    %264 = tpu.concatenate %263, %242 in 1 : vector<1x32xf32>, vector<1x32xf32> -> vector<1x64xf32>
    %cst_53 = arith.constant dense<0.000000e+00> : vector<1x128xf32>
    %265 = tpu.matmul %264, %1, %cst_53 {dimension_numbers = #tpu.dot_dimension_numbers<[1], [0], [0], [1], [0, 0, 1, 1], [], []>} : vector<1x64xf32>, vector<64x128xf32>, vector<1x128xf32> -> vector<1x128xf32>
    %266 = arith.addf %265, %2 : vector<1x128xf32>
    %267 = arith.negf %266 : vector<1x128xf32>
    %268 = math.exp %267 : vector<1x128xf32>
    %cst_54 = arith.constant 1.000000e+00 : f32
    %269 = vector.broadcast %cst_54 : f32 to vector<1x128xf32>
    %270 = arith.addf %269, %268 : vector<1x128xf32>
    %271 = arith.divf %269, %270 : vector<1x128xf32>
    %272 = math.tanh %266 : vector<1x128xf32>
    %273 = vector.extract_strided_slice %271 {offsets = [0, 0], sizes = [1, 32], strides = [1, 1]} : vector<1x128xf32> to vector<1x32xf32>
    %274 = vector.extract_strided_slice %271 {offsets = [0, 32], sizes = [1, 32], strides = [1, 1]} : vector<1x128xf32> to vector<1x32xf32>
    %275 = vector.extract_strided_slice %272 {offsets = [0, 64], sizes = [1, 32], strides = [1, 1]} : vector<1x128xf32> to vector<1x32xf32>
    %276 = vector.extract_strided_slice %271 {offsets = [0, 96], sizes = [1, 32], strides = [1, 1]} : vector<1x128xf32> to vector<1x32xf32>
    %277 = arith.mulf %274, %240 : vector<1x32xf32>
    %278 = arith.mulf %273, %275 : vector<1x32xf32>
    %279 = arith.addf %277, %278 : vector<1x32xf32>
    %280 = math.tanh %279 : vector<1x32xf32>
    %281 = arith.mulf %276, %280 : vector<1x32xf32>
    %282 = arith.index_cast %c6_i32 : i32 to index
    %c0_55 = arith.constant 0 : index
    %283 = vector.load %arg12[%282, %c0_55] : memref<8x32xf32, #tpu.memory_space<vmem>>, vector<1x32xf32>
    tpu.vector_store %arg12[%282, %c0_55], %281 {strides = array<i32>} : memref<8x32xf32, #tpu.memory_space<vmem>>, vector<1x32xf32>,
    %c7_i32 = arith.constant 7 : i32
    %cst_56 = arith.constant dense<0.000000e+00> : vector<1x128xf32>
    %284 = tpu.matmul %263, %0, %cst_56 {dimension_numbers = #tpu.dot_dimension_numbers<[1], [0], [0], [1], [0, 0, 1, 1], [], []>} : vector<1x32xf32>, vector<32x128xf32>, vector<1x128xf32> -> vector<1x128xf32>
    %285 = arith.index_cast %c7_i32 : i32 to index
    %c0_57 = arith.constant 0 : index
    %286 = vector.load %arg11[%285, %c0_57] : memref<8x128xf32, #tpu.memory_space<vmem>>, vector<1x128xf32>
    %287 = arith.addf %284, %286 : vector<1x128xf32>
    %288 = arith.negf %287 : vector<1x128xf32>
    %289 = math.exp %288 : vector<1x128xf32>
    %cst_58 = arith.constant 1.000000e+00 : f32
    %290 = vector.broadcast %cst_58 : f32 to vector<1x128xf32>
    %291 = arith.addf %290, %289 : vector<1x128xf32>
    %292 = arith.divf %290, %291 : vector<1x128xf32>
    %293 = math.tanh %287 : vector<1x128xf32>
    %294 = vector.extract_strided_slice %292 {offsets = [0, 0], sizes = [1, 32], strides = [1, 1]} : vector<1x128xf32> to vector<1x32xf32>
    %295 = vector.extract_strided_slice %292 {offsets = [0, 32], sizes = [1, 32], strides = [1, 1]} : vector<1x128xf32> to vector<1x32xf32>
    %296 = vector.extract_strided_slice %293 {offsets = [0, 64], sizes = [1, 32], strides = [1, 1]} : vector<1x128xf32> to vector<1x32xf32>
    %297 = vector.extract_strided_slice %292 {offsets = [0, 96], sizes = [1, 32], strides = [1, 1]} : vector<1x128xf32> to vector<1x32xf32>
    %298 = arith.mulf %295, %261 : vector<1x32xf32>
    %299 = arith.mulf %294, %296 : vector<1x32xf32>
    %300 = arith.addf %298, %299 : vector<1x32xf32>
    %301 = math.tanh %300 : vector<1x32xf32>
    %302 = arith.mulf %297, %301 : vector<1x32xf32>
    %303 = tpu.concatenate %302, %281 in 1 : vector<1x32xf32>, vector<1x32xf32> -> vector<1x64xf32>
    %cst_59 = arith.constant dense<0.000000e+00> : vector<1x128xf32>
    %304 = tpu.matmul %303, %1, %cst_59 {dimension_numbers = #tpu.dot_dimension_numbers<[1], [0], [0], [1], [0, 0, 1, 1], [], []>} : vector<1x64xf32>, vector<64x128xf32>, vector<1x128xf32> -> vector<1x128xf32>
    %305 = arith.addf %304, %2 : vector<1x128xf32>
    %306 = arith.negf %305 : vector<1x128xf32>
    %307 = math.exp %306 : vector<1x128xf32>
    %cst_60 = arith.constant 1.000000e+00 : f32
    %308 = vector.broadcast %cst_60 : f32 to vector<1x128xf32>
    %309 = arith.addf %308, %307 : vector<1x128xf32>
    %310 = arith.divf %308, %309 : vector<1x128xf32>
    %311 = math.tanh %305 : vector<1x128xf32>
    %312 = vector.extract_strided_slice %310 {offsets = [0, 0], sizes = [1, 32], strides = [1, 1]} : vector<1x128xf32> to vector<1x32xf32>
    %313 = vector.extract_strided_slice %310 {offsets = [0, 32], sizes = [1, 32], strides = [1, 1]} : vector<1x128xf32> to vector<1x32xf32>
    %314 = vector.extract_strided_slice %311 {offsets = [0, 64], sizes = [1, 32], strides = [1, 1]} : vector<1x128xf32> to vector<1x32xf32>
    %315 = vector.extract_strided_slice %310 {offsets = [0, 96], sizes = [1, 32], strides = [1, 1]} : vector<1x128xf32> to vector<1x32xf32>
    %316 = arith.mulf %313, %279 : vector<1x32xf32>
    %317 = arith.mulf %312, %314 : vector<1x32xf32>
    %318 = arith.addf %316, %317 : vector<1x32xf32>
    %319 = math.tanh %318 : vector<1x32xf32>
    %320 = arith.mulf %315, %319 : vector<1x32xf32>
    %321 = arith.index_cast %c7_i32 : i32 to index
    %c0_61 = arith.constant 0 : index
    %322 = vector.load %arg12[%321, %c0_61] : memref<8x32xf32, #tpu.memory_space<vmem>>, vector<1x32xf32>
    tpu.vector_store %arg12[%321, %c0_61], %320 {strides = array<i32>} : memref<8x32xf32, #tpu.memory_space<vmem>>, vector<1x32xf32>,
    %c8_i32 = arith.constant 8 : i32
    %c0_62 = arith.constant 0 : index
    %c0_63 = arith.constant 0 : index
    %323 = vector.load %arg12[%c0_62, %c0_63] : memref<8x32xf32, #tpu.memory_space<vmem>>, vector<8x32xf32>
    %c0_64 = arith.constant 0 : index
    %c0_65 = arith.constant 0 : index
    %324 = vector.load %arg6[%c0_64, %c0_65] : memref<32x4xf32, #tpu.memory_space<vmem>>, vector<32x4xf32>
    %cst_66 = arith.constant dense<0.000000e+00> : vector<8x4xf32>
    %325 = tpu.matmul %323, %324, %cst_66 {dimension_numbers = #tpu.dot_dimension_numbers<[1], [0], [0], [1], [0, 0, 1, 1], [], []>} : vector<8x32xf32>, vector<32x4xf32>, vector<8x4xf32> -> vector<8x4xf32>
    %c0_67 = arith.constant 0 : index
    %c0_68 = arith.constant 0 : index
    %326 = vector.load %arg7[%c0_67, %c0_68] : memref<1x4xf32, #tpu.memory_space<vmem>>, vector<1x4xf32>
    %327 = vector.broadcast %326 : vector<1x4xf32> to vector<8x4xf32>
    %328 = arith.addf %325, %327 : vector<8x4xf32>
    %c0_69 = arith.constant 0 : index
    %c0_70 = arith.constant 0 : index
    %329 = vector.load %arg8[%c0_69, %c0_70] : memref<8x4xf32, #tpu.memory_space<vmem>>, vector<8x4xf32>
    tpu.vector_store %arg8[%c0_69, %c0_70], %328 {strides = array<i32>} : memref<8x4xf32, #tpu.memory_space<vmem>>, vector<8x4xf32>,
    %c0_71 = arith.constant 0 : index
    %c0_72 = arith.constant 0 : index
    %330 = vector.load %arg9[%c0_71, %c0_72] : memref<2x32xf32, #tpu.memory_space<vmem>>, vector<1x32xf32>
    tpu.vector_store %arg9[%c0_71, %c0_72], %302 {strides = array<i32>} : memref<2x32xf32, #tpu.memory_space<vmem>>, vector<1x32xf32>,
    %c1 = arith.constant 1 : index
    %c0_73 = arith.constant 0 : index
    %331 = vector.load %arg9[%c1, %c0_73] : memref<2x32xf32, #tpu.memory_space<vmem>>, vector<1x32xf32>
    tpu.vector_store %arg9[%c1, %c0_73], %320 {strides = array<i32>} : memref<2x32xf32, #tpu.memory_space<vmem>>, vector<1x32xf32>,
    %c0_74 = arith.constant 0 : index
    %c0_75 = arith.constant 0 : index
    %332 = vector.load %arg10[%c0_74, %c0_75] : memref<2x32xf32, #tpu.memory_space<vmem>>, vector<1x32xf32>
    tpu.vector_store %arg10[%c0_74, %c0_75], %300 {strides = array<i32>} : memref<2x32xf32, #tpu.memory_space<vmem>>, vector<1x32xf32>,
    %c1_76 = arith.constant 1 : index
    %c0_77 = arith.constant 0 : index
    %333 = vector.load %arg10[%c1_76, %c0_77] : memref<2x32xf32, #tpu.memory_space<vmem>>, vector<1x32xf32>
    tpu.vector_store %arg10[%c1_76, %c0_77], %318 {strides = array<i32>} : memref<2x32xf32, #tpu.memory_space<vmem>>, vector<1x32xf32>,
    return
  }
}

</mosaic_0001>

<llo_original>
// kernel: tpu_custom_call.1
$region0: #{tpu_custom_call.1}
  #allocation0 [shape = 'u32[]', space=smem, size = 0x4, offset = 0x4, fixed_abs, tag = 'smem constant byte address 0x4 - core index']
  #allocation1 [shape = 'u32[72,128]{1,0:T(1,128)}', space=vmem, size = 0x9000, scoped, tag = 'internal scratch']
  #allocation2 [shape = 'f32[8,128]{1,0:T(8,128)}', space=vmem, size = 0x1000, scoped, tag = 'scratch operand']
  #allocation3 [shape = 'f32[8,32]{1,0:T(8,128)}', space=vmem, size = 0x1000, scoped, tag = 'scratch operand']
  %s0 = inlined_call_operand.vmem [shape: f32[8,4], index: 0, kind: input, shape index: {}]
  %s1 = inlined_call_operand.vmem [shape: f32[4,128], index: 1, kind: input, shape index: {}]
  %s2 = inlined_call_operand.vmem [shape: f32[32,128], index: 2, kind: input, shape index: {}]
  %s3 = inlined_call_operand.vmem [shape: f32[1,128], index: 3, kind: input, shape index: {}]
  %s4 = inlined_call_operand.hbm [shape: f32[64,128], index: 4, kind: input, shape index: {}]
  %s5 = inlined_call_operand.vmem [shape: f32[1,128], index: 5, kind: input, shape index: {}]
  %s6 = inlined_call_operand.vmem [shape: f32[32,4], index: 6, kind: input, shape index: {}]
  %s7 = inlined_call_operand.vmem [shape: f32[1,4], index: 7, kind: input, shape index: {}]
  %s8 = inlined_call_operand.vmem [shape: f32[8,4], index: 8, kind: output, shape index: {0}]
  %s9 = inlined_call_operand.hbm [shape: f32[2,32], index: 9, kind: output, shape index: {1}]
  %s10 = inlined_call_operand.hbm [shape: f32[2,32], index: 10, kind: output, shape index: {2}]
  %11 = xla_tuple %s8, %s9, %s10
  %s12 = sld [smem:[#allocation0]]
  $region62: #{tpu_custom_call.1} parent=0
    _
  %s14 = ssub.s32 1, %s12
  %s15 = scalar_select 0, %s14, %s12
  $region1: #{tpu_custom_call.1} parent=0
    #allocation4 [shape = 'u8[32768]{0}', space=vmem, size = 0x8000, scoped, tag = 'input window, operand 4, single buffered']
    #allocation5 [shape = 's32[1]{0}', space=sflag, size = 0x4, scoped, tag = 'scoped memory for tpu_custom_call.1']
    #allocation6 [shape = 's32[1]{0}', space=sflag, size = 0x4, scoped, tag = 'scoped memory for tpu_custom_call.1']
    #allocation7 [shape = 'u8[1024]{0}', space=vmem, size = 0x400, scoped, tag = 'output window, operand 1, single buffered']
    #allocation8 [shape = 'u8[1024]{0}', space=vmem, size = 0x400, scoped, tag = 'output window, operand 2, single buffered']
    #allocation9 [shape = 's32[1]{0}', space=sflag, size = 0x4, scoped, tag = 'scoped memory for tpu_custom_call.1']
    %16 = vsyncpa [#allocation5], 0
    %17 = vsyncpa [#allocation6], 0
    %18 = vsyncpa [#allocation9], 0
    // Predicated region
    $region2: #{tpu_custom_call.1} parent=1 // pred_check
      _
    $region3: #{tpu_custom_call.1} parent=1 // pred_check_branch
      %20 = sbr.rel (0) target = $region5
    $region4: #{tpu_custom_call.1} parent=1 // pred_region
      _
    $region5: #{tpu_custom_call.1} parent=1 // pred_fallthru
      _
    // Predicated region
    $region6: #{tpu_custom_call.1} parent=1 // pred_check
      _
    $region7: #{tpu_custom_call.1} parent=1 // pred_check_branch
      %22 = sbr.rel (0) target = $region9
    $region8: #{tpu_custom_call.1} parent=1 // pred_region
      _
    $region9: #{tpu_custom_call.1} parent=1 // pred_fallthru
      _
    // Predicated region
    $region10: #{tpu_custom_call.1} parent=1 // pred_check
      _
    $region11: #{tpu_custom_call.1} parent=1 // pred_check_branch
      %24 = sbr.rel (0) target = $region13
    $region12: #{tpu_custom_call.1} parent=1 // pred_region
      _
    $region13: #{tpu_custom_call.1} parent=1 // pred_fallthru
      _
    // Predicated region
    $region14: #{tpu_custom_call.1} parent=1 // pred_check
      _
    $region15: #{tpu_custom_call.1} parent=1 // pred_check_branch
      %26 = sbr.rel (0) target = $region17
    $region16: #{tpu_custom_call.1} parent=1 // pred_region
      _
    $region17: #{tpu_custom_call.1} parent=1 // pred_fallthru
      _
    // Predicated region
    $region18: #{tpu_custom_call.1} parent=1 // pred_check
      _
    $region19: #{tpu_custom_call.1} parent=1 // pred_check_branch
      %28 = sbr.rel (0) target = $region21
    $region20: #{tpu_custom_call.1} parent=1 // pred_region
      %30 = vsyncadd [#allocation5], 0
      %s31 = sshll.u32 %s4, 4
      %s32 = int_to_ptr.hbm [resolvable:$true] %s31
      %s33 = sshll.u32 [#allocation4], 4
      %s34 = int_to_ptr.vmem [resolvable:$true] %s33
      %39 = dma.hbm_to_vmem [thread:$0]  %s32, 1024, %s34, [#allocation5], 128, 128, 8
    $region21: #{tpu_custom_call.1} parent=1 // pred_fallthru
      _
    // Predicated region
    $region22: #{tpu_custom_call.1} parent=1 // pred_check
      _
    $region23: #{tpu_custom_call.1} parent=1 // pred_check_branch
      %41 = sbr.rel (0) target = $region25
    $region24: #{tpu_custom_call.1} parent=1 // pred_region
      _
    $region25: #{tpu_custom_call.1} parent=1 // pred_fallthru
      _
    // Predicated region
    $region26: #{tpu_custom_call.1} parent=1 // pred_check
      _
    $region27: #{tpu_custom_call.1} parent=1 // pred_check_branch
      %43 = sbr.rel (0) target = $region29
    $region28: #{tpu_custom_call.1} parent=1 // pred_region
      _
    $region29: #{tpu_custom_call.1} parent=1 // pred_fallthru
      _
    // Predicated region
    $region30: #{tpu_custom_call.1} parent=1 // pred_check
      _
    $region31: #{tpu_custom_call.1} parent=1 // pred_check_branch
      %45 = sbr.rel (0) target = $region33
    $region32: #{tpu_custom_call.1} parent=1 // pred_region
      _
    $region33: #{tpu_custom_call.1} parent=1 // pred_fallthru
      _
    // Predicated region
    $region34: #{tpu_custom_call.1} parent=1 // pred_check
      _
    $region35: #{tpu_custom_call.1} parent=1 // pred_check_branch
      %47 = sbr.rel (0) target = $region37
    $region36: #{tpu_custom_call.1} parent=1 // pred_region
      %49 = dma.done [#allocation5], 1024
    $region37: #{tpu_custom_call.1} parent=1 // pred_fallthru
      _
    %v50 = vld [vmem:[%s2] sm:$0xff]
    %v51 = vld [vmem:[%s2 + $0x8] sm:$0xff]
    %v52 = vld [vmem:[%s2 + $0x10] sm:$0xff]
    %v53 = vld [vmem:[%s2 + $0x18] sm:$0xff]
    %v54 = vld [vmem:[#allocation4] sm:$0xff]
    %v55 = vld [vmem:[#allocation4 + $0x8] sm:$0xff]
    %v56 = vld [vmem:[#allocation4 + $0x10] sm:$0xff]
    %v57 = vld [vmem:[#allocation4 + $0x18] sm:$0xff]
    %v58 = vld [vmem:[#allocation4 + $0x20] sm:$0xff]
    %v59 = vld [vmem:[#allocation4 + $0x28] sm:$0xff]
    %v60 = vld [vmem:[#allocation4 + $0x30] sm:$0xff]
    %v61 = vld [vmem:[#allocation4 + $0x38] sm:$0xff]
    %v62 = vld [vmem:[%s5] sm:$0x1]
    %v63 = vld [vmem:[%s0] sm:$0xff]
    %v64 = vld [vmem:[%s1] sm:$0xf]
    %v65 = vld [vmem:[%s3] sm:$0x1]
    %v67 = vperm.slane %v65, 0
    %vm69 = vcmask 31744
    %v71 = vsel %vm69, %v63, 0
    %vm73 = vcmask 1043456
    %v75 = vsel %vm73, %v64, 0
    %77 = vmatpush.msra.mxu0 0.0
    %78 = vmatpush.msra.mxu0 0.0
    %79 = vmatpush.msra.mxu0 0.0
    %80 = vmatpush.msra.mxu0 0.0
    %81 = vmatpush.msra.mxu0 0.0
    %82 = vmatpush.msra.mxu0 0.0
    %83 = vmatpush.msra.mxu0 0.0
    %84 = vmatpush.msra.mxu0 0.0
    %85 = vmatpush.msra.mxu0 0.0
    %86 = vmatpush.msra.mxu0 0.0
    %87 = vmatpush.msra.mxu0 0.0
    %88 = vmatpush.msra.mxu0 0.0
    %89 = vmatpush.msra.mxu0 0.0
    %90 = vmatpush.msra.mxu0 0.0
    %91 = vmatpush.msra.mxu0 0.0
    %92 = vmatpush.msra.mxu0 %v75
    %93 = vmatmul.f32.gmra.mxu0 %v71
    %v94 = vpop.f32.mrf.mxu0
    %v95 = vadd.f32 %v67, %v94
    %96 = vdwg.mxu0
    %97 = vst [vmem:[#allocation2] sm:$0xff] %v95
    %v98 = vld [vmem:[#allocation2] sm:$0x1]
    %vm99 = vcmask 261120
    %v101 = vsel %vm99, 0.0, 0
    %103 = vmatpush.msra.mxu0 0.0
    %104 = vmatpush.msra.mxu0 0.0
    %105 = vmatpush.msra.mxu0 0.0
    %106 = vmatpush.msra.mxu0 0.0
    %107 = vmatpush.msra.mxu0 0.0
    %108 = vmatpush.msra.mxu0 0.0
    %109 = vmatpush.msra.mxu0 0.0
    %110 = vmatpush.msra.mxu0 0.0
    %111 = vmatpush.msra.mxu0 0.0
    %112 = vmatpush.msra.mxu0 0.0
    %113 = vmatpush.msra.mxu0 0.0
    %114 = vmatpush.msra.mxu0 0.0
    %115 = vmatpush.msra.mxu0 %v53
    %116 = vmatpush.msra.mxu0 %v52
    %117 = vmatpush.msra.mxu0 %v51
    %118 = vmatpush.msra.mxu0 %v50
    %119 = vmatmul.f32.gmra.mxu0 %v101
    %v120 = vpop.f32.mrf.mxu0
    %v121 = vadd.f32 %v98, %v120
    %122 = vdwg.mxu0
    %v123 = vxor.u32 %v121, 2147483648
    %v124 = vmul.f32 %v123, 1.442695
    %v125 = vpow.pop %v124
    %v126 = vadd.f32 %v125, 1.0
    %v127 = vrcp.pop %v126
    %v128 = vmul.f32 %v126, %v127
    %v129 = vsub.f32 1.0, %v128
    %v130 = vmul.f32 %v127, %v129
    %v131 = vadd.f32 %v127, %v130
    %vm132 = vweird.f32 %v126
    %vm133 = vweird.f32 %v127
    %vm134 = vmor %vm132, %vm133
    %v135 = vsel %vm134, %v127, %v131
    %v136 = vand.u32 2147483647, %v126
    %vm137 = vcmp.eq.f32.partialorder %v136, 8.507059e+37
    %v138 = vand.u32 %v126, 2147483648
    %v139 = vor.u32 1.1754944e-38, %v138
    %v140 = vsel %vm137, %v139, %v135
    %v141 = vmul.f32 1.0, %v140
    %v142 = vtanh.pop %v121
    %v143 = vmul.f32 %v141, 0.0
    %145 = vrot.lane.b32.xlu0 %v142, 64
    %v146 = vpop.permute.xlu0 %145
    %v148 = vmul.f32 %v141, %v146
    %150 = vrot.lane.b32.xlu0 %v148, 32
    %v151 = vpop.permute.xlu0 %150
    %v153 = vadd.f32 %v143, %v151
    %v154 = vtanh.pop %v153
    %156 = vrot.lane.b32.xlu0 %v154, 64
    %v157 = vpop.permute.xlu0 %156
    %v159 = vmul.f32 %v141, %v157
    %161 = vrot.lane.b32.xlu0 %v159, 32
    %v162 = vpop.permute.xlu0 %161
    %v164 = vsel %vm99, %v162, 0.0
    %vm165 = vcmask 523264
    %v167 = vsel %vm165, %v164, 0
    %169 = vmatpush.msra.mxu0 0.0
    %170 = vmatpush.msra.mxu0 0.0
    %171 = vmatpush.msra.mxu0 0.0
    %172 = vmatpush.msra.mxu0 0.0
    %173 = vmatpush.msra.mxu0 0.0
    %174 = vmatpush.msra.mxu0 0.0
    %175 = vmatpush.msra.mxu0 0.0
    %176 = vmatpush.msra.mxu0 0.0
    %177 = vmatpush.msra.mxu0 %v61
    %178 = vmatpush.msra.mxu0 %v60
    %179 = vmatpush.msra.mxu0 %v59
    %180 = vmatpush.msra.mxu0 %v58
    %181 = vmatpush.msra.mxu0 %v57
    %182 = vmatpush.msra.mxu0 %v56
    %183 = vmatpush.msra.mxu0 %v55
    %184 = vmatpush.msra.mxu0 %v54
    %185 = vmatmul.f32.gmra.mxu0 %v167
    %v186 = vpop.f32.mrf.mxu0
    %v187 = vadd.f32 %v62, %v186
    %188 = vdwg.mxu0
    %v189 = vxor.u32 %v187, 2147483648
    %v190 = vmul.f32 %v189, 1.442695
    %v191 = vpow.pop %v190
    %v192 = vadd.f32 %v191, 1.0
    %v193 = vrcp.pop %v192
    %v194 = vmul.f32 %v192, %v193
    %v195 = vsub.f32 1.0, %v194
    %v196 = vmul.f32 %v193, %v195
    %v197 = vadd.f32 %v193, %v196
    %vm198 = vweird.f32 %v192
    %vm199 = vweird.f32 %v193
    %vm200 = vmor %vm198, %vm199
    %v201 = vsel %vm200, %v193, %v197
    %v202 = vand.u32 2147483647, %v192
    %vm203 = vcmp.eq.f32.partialorder %v202, 8.507059e+37
    %v204 = vand.u32 %v192, 2147483648
    %v205 = vor.u32 1.1754944e-38, %v204
    %v206 = vsel %vm203, %v205, %v201
    %v207 = vmul.f32 1.0, %v206
    %v208 = vtanh.pop %v187
    %v209 = vmul.f32 %v207, 0.0
    %211 = vrot.lane.b32.xlu0 %v208, 64
    %v212 = vpop.permute.xlu0 %211
    %v214 = vmul.f32 %v207, %v212
    %216 = vrot.lane.b32.xlu0 %v214, 32
    %v217 = vpop.permute.xlu0 %216
    %v219 = vadd.f32 %v209, %v217
    %v220 = vtanh.pop %v219
    %222 = vrot.lane.b32.xlu0 %v220, 64
    %v223 = vpop.permute.xlu0 %222
    %v225 = vmul.f32 %v207, %v223
    %227 = vrot.lane.b32.xlu0 %v225, 32
    %v228 = vpop.permute.xlu0 %227
    %vm230 = vcmask 253952
    %231 = vst.msk [vmem:[#allocation3] sm:$0x1] %vm230, %v228
    %v232 = vld [vmem:[#allocation2 + $0x1] sm:$0x1]
    %v233 = vsel %vm99, %v162, 0
    %235 = vmatpush.msra.mxu0 0.0
    %236 = vmatpush.msra.mxu0 0.0
    %237 = vmatpush.msra.mxu0 0.0
    %238 = vmatpush.msra.mxu0 0.0
    %239 = vmatpush.msra.mxu0 0.0
    %240 = vmatpush.msra.mxu0 0.0
    %241 = vmatpush.msra.mxu0 0.0
    %242 = vmatpush.msra.mxu0 0.0
    %243 = vmatpush.msra.mxu0 0.0
    %244 = vmatpush.msra.mxu0 0.0
    %245 = vmatpush.msra.mxu0 0.0
    %246 = vmatpush.msra.mxu0 0.0
    %247 = vmatpush.msra.mxu0 %v53
    %248 = vmatpush.msra.mxu0 %v52
    %249 = vmatpush.msra.mxu0 %v51
    %250 = vmatpush.msra.mxu0 %v50
    %251 = vmatmul.f32.gmra.mxu0 %v233
    %v252 = vpop.f32.mrf.mxu0
    %v253 = vadd.f32 %v232, %v252
    %254 = vdwg.mxu0
    %v255 = vxor.u32 %v253, 2147483648
    %v256 = vmul.f32 %v255, 1.442695
    %v257 = vpow.pop %v256
    %v258 = vadd.f32 %v257, 1.0
    %v259 = vrcp.pop %v258
    %v260 = vmul.f32 %v258, %v259
    %v261 = vsub.f32 1.0, %v260
    %v262 = vmul.f32 %v259, %v261
    %v263 = vadd.f32 %v259, %v262
    %vm264 = vweird.f32 %v258
    %vm265 = vweird.f32 %v259
    %vm266 = vmor %vm264, %vm265
    %v267 = vsel %vm266, %v259, %v263
    %v268 = vand.u32 2147483647, %v258
    %vm269 = vcmp.eq.f32.partialorder %v268, 8.507059e+37
    %v270 = vand.u32 %v258, 2147483648
    %v271 = vor.u32 1.1754944e-38, %v270
    %v272 = vsel %vm269, %v271, %v267
    %v273 = vmul.f32 1.0, %v272
    %v274 = vtanh.pop %v253
    %v275 = vmul.f32 %v273, %v153
    %277 = vrot.lane.b32.xlu0 %v274, 64
    %v278 = vpop.permute.xlu0 %277
    %v280 = vmul.f32 %v273, %v278
    %282 = vrot.lane.b32.xlu0 %v280, 32
    %v283 = vpop.permute.xlu0 %282
    %v285 = vadd.f32 %v275, %v283
    %v286 = vtanh.pop %v285
    %288 = vrot.lane.b32.xlu0 %v286, 64
    %v289 = vpop.permute.xlu0 %288
    %v291 = vmul.f32 %v273, %v289
    %293 = vrot.lane.b32.xlu0 %v291, 32
    %v294 = vpop.permute.xlu0 %293
    %296 = vrot.lane.b32.xlu0 %v225, 64
    %v297 = vpop.permute.xlu0 %296
    %v299 = vsel %vm99, %v294, %v297
    %v301 = vsel %vm165, %v299, 0
    %303 = vmatpush.msra.mxu0 0.0
    %304 = vmatpush.msra.mxu0 0.0
    %305 = vmatpush.msra.mxu0 0.0
    %306 = vmatpush.msra.mxu0 0.0
    %307 = vmatpush.msra.mxu0 0.0
    %308 = vmatpush.msra.mxu0 0.0
    %309 = vmatpush.msra.mxu0 0.0
    %310 = vmatpush.msra.mxu0 0.0
    %311 = vmatpush.msra.mxu0 %v61
    %312 = vmatpush.msra.mxu0 %v60
    %313 = vmatpush.msra.mxu0 %v59
    %314 = vmatpush.msra.mxu0 %v58
    %315 = vmatpush.msra.mxu0 %v57
    %316 = vmatpush.msra.mxu0 %v56
    %317 = vmatpush.msra.mxu0 %v55
    %318 = vmatpush.msra.mxu0 %v54
    %319 = vmatmul.f32.gmra.mxu0 %v301
    %v320 = vpop.f32.mrf.mxu0
    %v321 = vadd.f32 %v62, %v320
    %322 = vdwg.mxu0
    %v323 = vxor.u32 %v321, 2147483648
    %v324 = vmul.f32 %v323, 1.442695
    %v325 = vpow.pop %v324
    %v326 = vadd.f32 %v325, 1.0
    %v327 = vrcp.pop %v326
    %v328 = vmul.f32 %v326, %v327
    %v329 = vsub.f32 1.0, %v328
    %v330 = vmul.f32 %v327, %v329
    %v331 = vadd.f32 %v327, %v330
    %vm332 = vweird.f32 %v326
    %vm333 = vweird.f32 %v327
    %vm334 = vmor %vm332, %vm333
    %v335 = vsel %vm334, %v327, %v331
    %v336 = vand.u32 2147483647, %v326
    %vm337 = vcmp.eq.f32.partialorder %v336, 8.507059e+37
    %v338 = vand.u32 %v326, 2147483648
    %v339 = vor.u32 1.1754944e-38, %v338
    %v340 = vsel %vm337, %v339, %v335
    %v341 = vmul.f32 1.0, %v340
    %v342 = vtanh.pop %v321
    %v343 = vmul.f32 %v341, %v219
    %345 = vrot.lane.b32.xlu0 %v342, 64
    %v346 = vpop.permute.xlu0 %345
    %v348 = vmul.f32 %v341, %v346
    %350 = vrot.lane.b32.xlu0 %v348, 32
    %v351 = vpop.permute.xlu0 %350
    %v353 = vadd.f32 %v343, %v351
    %v354 = vtanh.pop %v353
    %356 = vrot.lane.b32.xlu0 %v354, 64
    %v357 = vpop.permute.xlu0 %356
    %v359 = vmul.f32 %v341, %v357
    %361 = vrot.lane.b32.xlu0 %v359, 32
    %v362 = vpop.permute.xlu0 %361
    %364 = vst.msk [vmem:[#allocation3 + $0x1] sm:$0x1] %vm230, %v362
    %v365 = vld [vmem:[#allocation2 + $0x2] sm:$0x1]
    %v366 = vsel %vm99, %v294, 0
    %368 = vmatpush.msra.mxu0 0.0
    %369 = vmatpush.msra.mxu0 0.0
    %370 = vmatpush.msra.mxu0 0.0
    %371 = vmatpush.msra.mxu0 0.0
    %372 = vmatpush.msra.mxu0 0.0
    %373 = vmatpush.msra.mxu0 0.0
    %374 = vmatpush.msra.mxu0 0.0
    %375 = vmatpush.msra.mxu0 0.0
    %376 = vmatpush.msra.mxu0 0.0
    %377 = vmatpush.msra.mxu0 0.0
    %378 = vmatpush.msra.mxu0 0.0
    %379 = vmatpush.msra.mxu0 0.0
    %380 = vmatpush.msra.mxu0 %v53
    %381 = vmatpush.msra.mxu0 %v52
    %382 = vmatpush.msra.mxu0 %v51
    %383 = vmatpush.msra.mxu0 %v50
    %384 = vmatmul.f32.gmra.mxu0 %v366
    %v385 = vpop.f32.mrf.mxu0
    %v386 = vadd.f32 %v365, %v385
    %387 = vdwg.mxu0
    %v388 = vxor.u32 %v386, 2147483648
    %v389 = vmul.f32 %v388, 1.442695
    %v390 = vpow.pop %v389
    %v391 = vadd.f32 %v390, 1.0
    %v392 = vrcp.pop %v391
    %v393 = vmul.f32 %v391, %v392
    %v394 = vsub.f32 1.0, %v393
    %v395 = vmul.f32 %v392, %v394
    %v396 = vadd.f32 %v392, %v395
    %vm397 = vweird.f32 %v391
    %vm398 = vweird.f32 %v392
    %vm399 = vmor %vm397, %vm398
    %v400 = vsel %vm399, %v392, %v396
    %v401 = vand.u32 2147483647, %v391
    %vm402 = vcmp.eq.f32.partialorder %v401, 8.507059e+37
    %v403 = vand.u32 %v391, 2147483648
    %v404 = vor.u32 1.1754944e-38, %v403
    %v405 = vsel %vm402, %v404, %v400
    %v406 = vmul.f32 1.0, %v405
    %v407 = vtanh.pop %v386
    %v408 = vmul.f32 %v406, %v285
    %410 = vrot.lane.b32.xlu0 %v407, 64
    %v411 = vpop.permute.xlu0 %410
    %v413 = vmul.f32 %v406, %v411
    %415 = vrot.lane.b32.xlu0 %v413, 32
    %v416 = vpop.permute.xlu0 %415
    %v418 = vadd.f32 %v408, %v416
    %v419 = vtanh.pop %v418
    %421 = vrot.lane.b32.xlu0 %v419, 64
    %v422 = vpop.permute.xlu0 %421
    %v424 = vmul.f32 %v406, %v422
    %426 = vrot.lane.b32.xlu0 %v424, 32
    %v427 = vpop.permute.xlu0 %426
    %429 = vrot.lane.b32.xlu0 %v359, 64
    %v430 = vpop.permute.xlu0 %429
    %v432 = vsel %vm99, %v427, %v430
    %v434 = vsel %vm165, %v432, 0
    %436 = vmatpush.msra.mxu0 0.0
    %437 = vmatpush.msra.mxu0 0.0
    %438 = vmatpush.msra.mxu0 0.0
    %439 = vmatpush.msra.mxu0 0.0
    %440 = vmatpush.msra.mxu0 0.0
    %441 = vmatpush.msra.mxu0 0.0
    %442 = vmatpush.msra.mxu0 0.0
    %443 = vmatpush.msra.mxu0 0.0
    %444 = vmatpush.msra.mxu0 %v61
    %445 = vmatpush.msra.mxu0 %v60
    %446 = vmatpush.msra.mxu0 %v59
    %447 = vmatpush.msra.mxu0 %v58
    %448 = vmatpush.msra.mxu0 %v57
    %449 = vmatpush.msra.mxu0 %v56
    %450 = vmatpush.msra.mxu0 %v55
    %451 = vmatpush.msra.mxu0 %v54
    %452 = vmatmul.f32.gmra.mxu0 %v434
    %v453 = vpop.f32.mrf.mxu0
    %v454 = vadd.f32 %v62, %v453
    %455 = vdwg.mxu0
    %v456 = vxor.u32 %v454, 2147483648
    %v457 = vmul.f32 %v456, 1.442695
    %v458 = vpow.pop %v457
    %v459 = vadd.f32 %v458, 1.0
    %v460 = vrcp.pop %v459
    %v461 = vmul.f32 %v459, %v460
    %v462 = vsub.f32 1.0, %v461
    %v463 = vmul.f32 %v460, %v462
    %v464 = vadd.f32 %v460, %v463
    %vm465 = vweird.f32 %v459
    %vm466 = vweird.f32 %v460
    %vm467 = vmor %vm465, %vm466
    %v468 = vsel %vm467, %v460, %v464
    %v469 = vand.u32 2147483647, %v459
    %vm470 = vcmp.eq.f32.partialorder %v469, 8.507059e+37
    %v471 = vand.u32 %v459, 2147483648
    %v472 = vor.u32 1.1754944e-38, %v471
    %v473 = vsel %vm470, %v472, %v468
    %v474 = vmul.f32 1.0, %v473
    %v475 = vtanh.pop %v454
    %v476 = vmul.f32 %v474, %v353
    %478 = vrot.lane.b32.xlu0 %v475, 64
    %v479 = vpop.permute.xlu0 %478
    %v481 = vmul.f32 %v474, %v479
    %483 = vrot.lane.b32.xlu0 %v481, 32
    %v484 = vpop.permute.xlu0 %483
    %v486 = vadd.f32 %v476, %v484
    %v487 = vtanh.pop %v486
    %489 = vrot.lane.b32.xlu0 %v487, 64
    %v490 = vpop.permute.xlu0 %489
    %v492 = vmul.f32 %v474, %v490
    %494 = vrot.lane.b32.xlu0 %v492, 32
    %v495 = vpop.permute.xlu0 %494
    %497 = vst.msk [vmem:[#allocation3 + $0x2] sm:$0x1] %vm230, %v495
    %v498 = vld [vmem:[#allocation2 + $0x3] sm:$0x1]
    %v499 = vsel %vm99, %v427, 0
    %501 = vmatpush.msra.mxu0 0.0
    %502 = vmatpush.msra.mxu0 0.0
    %503 = vmatpush.msra.mxu0 0.0
    %504 = vmatpush.msra.mxu0 0.0
    %505 = vmatpush.msra.mxu0 0.0
    %506 = vmatpush.msra.mxu0 0.0
    %507 = vmatpush.msra.mxu0 0.0
    %508 = vmatpush.msra.mxu0 0.0
    %509 = vmatpush.msra.mxu0 0.0
    %510 = vmatpush.msra.mxu0 0.0
    %511 = vmatpush.msra.mxu0 0.0
    %512 = vmatpush.msra.mxu0 0.0
    %513 = vmatpush.msra.mxu0 %v53
    %514 = vmatpush.msra.mxu0 %v52
    %515 = vmatpush.msra.mxu0 %v51
    %516 = vmatpush.msra.mxu0 %v50
    %517 = vmatmul.f32.gmra.mxu0 %v499
    %v518 = vpop.f32.mrf.mxu0
    %v519 = vadd.f32 %v498, %v518
    %520 = vdwg.mxu0
    %v521 = vxor.u32 %v519, 2147483648
    %v522 = vmul.f32 %v521, 1.442695
    %v523 = vpow.pop %v522
    %v524 = vadd.f32 %v523, 1.0
    %v525 = vrcp.pop %v524
    %v526 = vmul.f32 %v524, %v525
    %v527 = vsub.f32 1.0, %v526
    %v528 = vmul.f32 %v525, %v527
    %v529 = vadd.f32 %v525, %v528
    %vm530 = vweird.f32 %v524
    %vm531 = vweird.f32 %v525
    %vm532 = vmor %vm530, %vm531
    %v533 = vsel %vm532, %v525, %v529
    %v534 = vand.u32 2147483647, %v524
    %vm535 = vcmp.eq.f32.partialorder %v534, 8.507059e+37
    %v536 = vand.u32 %v524, 2147483648
    %v537 = vor.u32 1.1754944e-38, %v536
    %v538 = vsel %vm535, %v537, %v533
    %v539 = vmul.f32 1.0, %v538
    %v540 = vtanh.pop %v519
    %v541 = vmul.f32 %v539, %v418
    %543 = vrot.lane.b32.xlu0 %v540, 64
    %v544 = vpop.permute.xlu0 %543
    %v546 = vmul.f32 %v539, %v544
    %548 = vrot.lane.b32.xlu0 %v546, 32
    %v549 = vpop.permute.xlu0 %548
    %v551 = vadd.f32 %v541, %v549
    %v552 = vtanh.pop %v551
    %554 = vrot.lane.b32.xlu0 %v552, 64
    %v555 = vpop.permute.xlu0 %554
    %v557 = vmul.f32 %v539, %v555
    %559 = vrot.lane.b32.xlu0 %v557, 32
    %v560 = vpop.permute.xlu0 %559
    %562 = vrot.lane.b32.xlu0 %v492, 64
    %v563 = vpop.permute.xlu0 %562
    %v565 = vsel %vm99, %v560, %v563
    %v567 = vsel %vm165, %v565, 0
    %569 = vmatpush.msra.mxu0 0.0
    %570 = vmatpush.msra.mxu0 0.0
    %571 = vmatpush.msra.mxu0 0.0
    %572 = vmatpush.msra.mxu0 0.0
    %573 = vmatpush.msra.mxu0 0.0
    %574 = vmatpush.msra.mxu0 0.0
    %575 = vmatpush.msra.mxu0 0.0
    %576 = vmatpush.msra.mxu0 0.0
    %577 = vmatpush.msra.mxu0 %v61
    %578 = vmatpush.msra.mxu0 %v60
    %579 = vmatpush.msra.mxu0 %v59
    %580 = vmatpush.msra.mxu0 %v58
    %581 = vmatpush.msra.mxu0 %v57
    %582 = vmatpush.msra.mxu0 %v56
    %583 = vmatpush.msra.mxu0 %v55
    %584 = vmatpush.msra.mxu0 %v54
    %585 = vmatmul.f32.gmra.mxu0 %v567
    %v586 = vpop.f32.mrf.mxu0
    %v587 = vadd.f32 %v62, %v586
    %588 = vdwg.mxu0
    %v589 = vxor.u32 %v587, 2147483648
    %v590 = vmul.f32 %v589, 1.442695
    %v591 = vpow.pop %v590
    %v592 = vadd.f32 %v591, 1.0
    %v593 = vrcp.pop %v592
    %v594 = vmul.f32 %v592, %v593
    %v595 = vsub.f32 1.0, %v594
    %v596 = vmul.f32 %v593, %v595
    %v597 = vadd.f32 %v593, %v596
    %vm598 = vweird.f32 %v592
    %vm599 = vweird.f32 %v593
    %vm600 = vmor %vm598, %vm599
    %v601 = vsel %vm600, %v593, %v597
    %v602 = vand.u32 2147483647, %v592
    %vm603 = vcmp.eq.f32.partialorder %v602, 8.507059e+37
    %v604 = vand.u32 %v592, 2147483648
    %v605 = vor.u32 1.1754944e-38, %v604
    %v606 = vsel %vm603, %v605, %v601
    %v607 = vmul.f32 1.0, %v606
    %v608 = vtanh.pop %v587
    %v609 = vmul.f32 %v607, %v486
    %611 = vrot.lane.b32.xlu0 %v608, 64
    %v612 = vpop.permute.xlu0 %611
    %v614 = vmul.f32 %v607, %v612
    %616 = vrot.lane.b32.xlu0 %v614, 32
    %v617 = vpop.permute.xlu0 %616
    %v619 = vadd.f32 %v609, %v617
    %v620 = vtanh.pop %v619
    %622 = vrot.lane.b32.xlu0 %v620, 64
    %v623 = vpop.permute.xlu0 %622
    %v625 = vmul.f32 %v607, %v623
    %627 = vrot.lane.b32.xlu0 %v625, 32
    %v628 = vpop.permute.xlu0 %627
    %630 = vst.msk [vmem:[#allocation3 + $0x3] sm:$0x1] %vm230, %v628
    %v631 = vld [vmem:[#allocation2 + $0x4] sm:$0x1]
    %v632 = vsel %vm99, %v560, 0
    %634 = vmatpush.msra.mxu0 0.0
    %635 = vmatpush.msra.mxu0 0.0
    %636 = vmatpush.msra.mxu0 0.0
    %637 = vmatpush.msra.mxu0 0.0
    %638 = vmatpush.msra.mxu0 0.0
    %639 = vmatpush.msra.mxu0 0.0
    %640 = vmatpush.msra.mxu0 0.0
    %641 = vmatpush.msra.mxu0 0.0
    %642 = vmatpush.msra.mxu0 0.0
    %643 = vmatpush.msra.mxu0 0.0
    %644 = vmatpush.msra.mxu0 0.0
    %645 = vmatpush.msra.mxu0 0.0
    %646 = vmatpush.msra.mxu0 %v53
    %647 = vmatpush.msra.mxu0 %v52
    %648 = vmatpush.msra.mxu0 %v51
    %649 = vmatpush.msra.mxu0 %v50
    %650 = vmatmul.f32.gmra.mxu0 %v632
    %v651 = vpop.f32.mrf.mxu0
    %v652 = vadd.f32 %v631, %v651
    %653 = vdwg.mxu0
    %v654 = vxor.u32 %v652, 2147483648
    %v655 = vmul.f32 %v654, 1.442695
    %v656 = vpow.pop %v655
    %v657 = vadd.f32 %v656, 1.0
    %v658 = vrcp.pop %v657
    %v659 = vmul.f32 %v657, %v658
    %v660 = vsub.f32 1.0, %v659
    %v661 = vmul.f32 %v658, %v660
    %v662 = vadd.f32 %v658, %v661
    %vm663 = vweird.f32 %v657
    %vm664 = vweird.f32 %v658
    %vm665 = vmor %vm663, %vm664
    %v666 = vsel %vm665, %v658, %v662
    %v667 = vand.u32 2147483647, %v657
    %vm668 = vcmp.eq.f32.partialorder %v667, 8.507059e+37
    %v669 = vand.u32 %v657, 2147483648
    %v670 = vor.u32 1.1754944e-38, %v669
    %v671 = vsel %vm668, %v670, %v666
    %v672 = vmul.f32 1.0, %v671
    %v673 = vtanh.pop %v652
    %v674 = vmul.f32 %v672, %v551
    %676 = vrot.lane.b32.xlu0 %v673, 64
    %v677 = vpop.permute.xlu0 %676
    %v679 = vmul.f32 %v672, %v677
    %681 = vrot.lane.b32.xlu0 %v679, 32
    %v682 = vpop.permute.xlu0 %681
    %v684 = vadd.f32 %v674, %v682
    %v685 = vtanh.pop %v684
    %687 = vrot.lane.b32.xlu0 %v685, 64
    %v688 = vpop.permute.xlu0 %687
    %v690 = vmul.f32 %v672, %v688
    %692 = vrot.lane.b32.xlu0 %v690, 32
    %v693 = vpop.permute.xlu0 %692
    %695 = vrot.lane.b32.xlu0 %v625, 64
    %v696 = vpop.permute.xlu0 %695
    %v698 = vsel %vm99, %v693, %v696
    %v700 = vsel %vm165, %v698, 0
    %702 = vmatpush.msra.mxu0 0.0
    %703 = vmatpush.msra.mxu0 0.0
    %704 = vmatpush.msra.mxu0 0.0
    %705 = vmatpush.msra.mxu0 0.0
    %706 = vmatpush.msra.mxu0 0.0
    %707 = vmatpush.msra.mxu0 0.0
    %708 = vmatpush.msra.mxu0 0.0
    %709 = vmatpush.msra.mxu0 0.0
    %710 = vmatpush.msra.mxu0 %v61
    %711 = vmatpush.msra.mxu0 %v60
    %712 = vmatpush.msra.mxu0 %v59
    %713 = vmatpush.msra.mxu0 %v58
    %714 = vmatpush.msra.mxu0 %v57
    %715 = vmatpush.msra.mxu0 %v56
    %716 = vmatpush.msra.mxu0 %v55
    %717 = vmatpush.msra.mxu0 %v54
    %718 = vmatmul.f32.gmra.mxu0 %v700
    %v719 = vpop.f32.mrf.mxu0
    %v720 = vadd.f32 %v62, %v719
    %721 = vdwg.mxu0
    %v722 = vxor.u32 %v720, 2147483648
    %v723 = vmul.f32 %v722, 1.442695
    %v724 = vpow.pop %v723
    %v725 = vadd.f32 %v724, 1.0
    %v726 = vrcp.pop %v725
    %v727 = vmul.f32 %v725, %v726
    %v728 = vsub.f32 1.0, %v727
    %v729 = vmul.f32 %v726, %v728
    %v730 = vadd.f32 %v726, %v729
    %vm731 = vweird.f32 %v725
    %vm732 = vweird.f32 %v726
    %vm733 = vmor %vm731, %vm732
    %v734 = vsel %vm733, %v726, %v730
    %v735 = vand.u32 2147483647, %v725
    %vm736 = vcmp.eq.f32.partialorder %v735, 8.507059e+37
    %v737 = vand.u32 %v725, 2147483648
    %v738 = vor.u32 1.1754944e-38, %v737
    %v739 = vsel %vm736, %v738, %v734
    %v740 = vmul.f32 1.0, %v739
    %v741 = vtanh.pop %v720
    %v742 = vmul.f32 %v740, %v619
    %744 = vrot.lane.b32.xlu0 %v741, 64
    %v745 = vpop.permute.xlu0 %744
    %v747 = vmul.f32 %v740, %v745
    %749 = vrot.lane.b32.xlu0 %v747, 32
    %v750 = vpop.permute.xlu0 %749
    %v752 = vadd.f32 %v742, %v750
    %v753 = vtanh.pop %v752
    %755 = vrot.lane.b32.xlu0 %v753, 64
    %v756 = vpop.permute.xlu0 %755
    %v758 = vmul.f32 %v740, %v756
    %760 = vrot.lane.b32.xlu0 %v758, 32
    %v761 = vpop.permute.xlu0 %760
    %763 = vst.msk [vmem:[#allocation3 + $0x4] sm:$0x1] %vm230, %v761
    %v764 = vld [vmem:[#allocation2 + $0x5] sm:$0x1]
    %v765 = vsel %vm99, %v693, 0
    %767 = vmatpush.msra.mxu0 0.0
    %768 = vmatpush.msra.mxu0 0.0
    %769 = vmatpush.msra.mxu0 0.0
    %770 = vmatpush.msra.mxu0 0.0
    %771 = vmatpush.msra.mxu0 0.0
    %772 = vmatpush.msra.mxu0 0.0
    %773 = vmatpush.msra.mxu0 0.0
    %774 = vmatpush.msra.mxu0 0.0
    %775 = vmatpush.msra.mxu0 0.0
    %776 = vmatpush.msra.mxu0 0.0
    %777 = vmatpush.msra.mxu0 0.0
    %778 = vmatpush.msra.mxu0 0.0
    %779 = vmatpush.msra.mxu0 %v53
    %780 = vmatpush.msra.mxu0 %v52
    %781 = vmatpush.msra.mxu0 %v51
    %782 = vmatpush.msra.mxu0 %v50
    %783 = vmatmul.f32.gmra.mxu0 %v765
    %v784 = vpop.f32.mrf.mxu0
    %v785 = vadd.f32 %v764, %v784
    %786 = vdwg.mxu0
    %v787 = vxor.u32 %v785, 2147483648
    %v788 = vmul.f32 %v787, 1.442695
    %v789 = vpow.pop %v788
    %v790 = vadd.f32 %v789, 1.0
    %v791 = vrcp.pop %v790
    %v792 = vmul.f32 %v790, %v791
    %v793 = vsub.f32 1.0, %v792
    %v794 = vmul.f32 %v791, %v793
    %v795 = vadd.f32 %v791, %v794
    %vm796 = vweird.f32 %v790
    %vm797 = vweird.f32 %v791
    %vm798 = vmor %vm796, %vm797
    %v799 = vsel %vm798, %v791, %v795
    %v800 = vand.u32 2147483647, %v790
    %vm801 = vcmp.eq.f32.partialorder %v800, 8.507059e+37
    %v802 = vand.u32 %v790, 2147483648
    %v803 = vor.u32 1.1754944e-38, %v802
    %v804 = vsel %vm801, %v803, %v799
    %v805 = vmul.f32 1.0, %v804
    %v806 = vtanh.pop %v785
    %v807 = vmul.f32 %v805, %v684
    %809 = vrot.lane.b32.xlu0 %v806, 64
    %v810 = vpop.permute.xlu0 %809
    %v812 = vmul.f32 %v805, %v810
    %814 = vrot.lane.b32.xlu0 %v812, 32
    %v815 = vpop.permute.xlu0 %814
    %v817 = vadd.f32 %v807, %v815
    %v818 = vtanh.pop %v817
    %820 = vrot.lane.b32.xlu0 %v818, 64
    %v821 = vpop.permute.xlu0 %820
    %v823 = vmul.f32 %v805, %v821
    %825 = vrot.lane.b32.xlu0 %v823, 32
    %v826 = vpop.permute.xlu0 %825
    %828 = vrot.lane.b32.xlu0 %v758, 64
    %v829 = vpop.permute.xlu0 %828
    %v831 = vsel %vm99, %v826, %v829
    %v833 = vsel %vm165, %v831, 0
    %835 = vmatpush.msra.mxu0 0.0
    %836 = vmatpush.msra.mxu0 0.0
    %837 = vmatpush.msra.mxu0 0.0
    %838 = vmatpush.msra.mxu0 0.0
    %839 = vmatpush.msra.mxu0 0.0
    %840 = vmatpush.msra.mxu0 0.0
    %841 = vmatpush.msra.mxu0 0.0
    %842 = vmatpush.msra.mxu0 0.0
    %843 = vmatpush.msra.mxu0 %v61
    %844 = vmatpush.msra.mxu0 %v60
    %845 = vmatpush.msra.mxu0 %v59
    %846 = vmatpush.msra.mxu0 %v58
    %847 = vmatpush.msra.mxu0 %v57
    %848 = vmatpush.msra.mxu0 %v56
    %849 = vmatpush.msra.mxu0 %v55
    %850 = vmatpush.msra.mxu0 %v54
    %851 = vmatmul.f32.gmra.mxu0 %v833
    %v852 = vpop.f32.mrf.mxu0
    %v853 = vadd.f32 %v62, %v852
    %854 = vdwg.mxu0
    %v855 = vxor.u32 %v853, 2147483648
    %v856 = vmul.f32 %v855, 1.442695
    %v857 = vpow.pop %v856
    %v858 = vadd.f32 %v857, 1.0
    %v859 = vrcp.pop %v858
    %v860 = vmul.f32 %v858, %v859
    %v861 = vsub.f32 1.0, %v860
    %v862 = vmul.f32 %v859, %v861
    %v863 = vadd.f32 %v859, %v862
    %vm864 = vweird.f32 %v858
    %vm865 = vweird.f32 %v859
    %vm866 = vmor %vm864, %vm865
    %v867 = vsel %vm866, %v859, %v863
    %v868 = vand.u32 2147483647, %v858
    %vm869 = vcmp.eq.f32.partialorder %v868, 8.507059e+37
    %v870 = vand.u32 %v858, 2147483648
    %v871 = vor.u32 1.1754944e-38, %v870
    %v872 = vsel %vm869, %v871, %v867
    %v873 = vmul.f32 1.0, %v872
    %v874 = vtanh.pop %v853
    %v875 = vmul.f32 %v873, %v752
    %877 = vrot.lane.b32.xlu0 %v874, 64
    %v878 = vpop.permute.xlu0 %877
    %v880 = vmul.f32 %v873, %v878
    %882 = vrot.lane.b32.xlu0 %v880, 32
    %v883 = vpop.permute.xlu0 %882
    %v885 = vadd.f32 %v875, %v883
    %v886 = vtanh.pop %v885
    %888 = vrot.lane.b32.xlu0 %v886, 64
    %v889 = vpop.permute.xlu0 %888
    %v891 = vmul.f32 %v873, %v889
    %893 = vrot.lane.b32.xlu0 %v891, 32
    %v894 = vpop.permute.xlu0 %893
    %896 = vst.msk [vmem:[#allocation3 + $0x5] sm:$0x1] %vm230, %v894
    %v897 = vld [vmem:[#allocation2 + $0x6] sm:$0x1]
    %v898 = vsel %vm99, %v826, 0
    %900 = vmatpush.msra.mxu0 0.0
    %901 = vmatpush.msra.mxu0 0.0
    %902 = vmatpush.msra.mxu0 0.0
    %903 = vmatpush.msra.mxu0 0.0
    %904 = vmatpush.msra.mxu0 0.0
    %905 = vmatpush.msra.mxu0 0.0
    %906 = vmatpush.msra.mxu0 0.0
    %907 = vmatpush.msra.mxu0 0.0
    %908 = vmatpush.msra.mxu0 0.0
    %909 = vmatpush.msra.mxu0 0.0
    %910 = vmatpush.msra.mxu0 0.0
    %911 = vmatpush.msra.mxu0 0.0
    %912 = vmatpush.msra.mxu0 %v53
    %913 = vmatpush.msra.mxu0 %v52
    %914 = vmatpush.msra.mxu0 %v51
    %915 = vmatpush.msra.mxu0 %v50
    %916 = vmatmul.f32.gmra.mxu0 %v898
    %v917 = vpop.f32.mrf.mxu0
    %v918 = vadd.f32 %v897, %v917
    %919 = vdwg.mxu0
    %v920 = vxor.u32 %v918, 2147483648
    %v921 = vmul.f32 %v920, 1.442695
    %v922 = vpow.pop %v921
    %v923 = vadd.f32 %v922, 1.0
    %v924 = vrcp.pop %v923
    %v925 = vmul.f32 %v923, %v924
    %v926 = vsub.f32 1.0, %v925
    %v927 = vmul.f32 %v924, %v926
    %v928 = vadd.f32 %v924, %v927
    %vm929 = vweird.f32 %v923
    %vm930 = vweird.f32 %v924
    %vm931 = vmor %vm929, %vm930
    %v932 = vsel %vm931, %v924, %v928
    %v933 = vand.u32 2147483647, %v923
    %vm934 = vcmp.eq.f32.partialorder %v933, 8.507059e+37
    %v935 = vand.u32 %v923, 2147483648
    %v936 = vor.u32 1.1754944e-38, %v935
    %v937 = vsel %vm934, %v936, %v932
    %v938 = vmul.f32 1.0, %v937
    %v939 = vtanh.pop %v918
    %v940 = vmul.f32 %v938, %v817
    %942 = vrot.lane.b32.xlu0 %v939, 64
    %v943 = vpop.permute.xlu0 %942
    %v945 = vmul.f32 %v938, %v943
    %947 = vrot.lane.b32.xlu0 %v945, 32
    %v948 = vpop.permute.xlu0 %947
    %v950 = vadd.f32 %v940, %v948
    %v951 = vtanh.pop %v950
    %953 = vrot.lane.b32.xlu0 %v951, 64
    %v954 = vpop.permute.xlu0 %953
    %v956 = vmul.f32 %v938, %v954
    %958 = vrot.lane.b32.xlu0 %v956, 32
    %v959 = vpop.permute.xlu0 %958
    %961 = vrot.lane.b32.xlu0 %v891, 64
    %v962 = vpop.permute.xlu0 %961
    %v964 = vsel %vm99, %v959, %v962
    %v966 = vsel %vm165, %v964, 0
    %968 = vmatpush.msra.mxu0 0.0
    %969 = vmatpush.msra.mxu0 0.0
    %970 = vmatpush.msra.mxu0 0.0
    %971 = vmatpush.msra.mxu0 0.0
    %972 = vmatpush.msra.mxu0 0.0
    %973 = vmatpush.msra.mxu0 0.0
    %974 = vmatpush.msra.mxu0 0.0
    %975 = vmatpush.msra.mxu0 0.0
    %976 = vmatpush.msra.mxu0 %v61
    %977 = vmatpush.msra.mxu0 %v60
    %978 = vmatpush.msra.mxu0 %v59
    %979 = vmatpush.msra.mxu0 %v58
    %980 = vmatpush.msra.mxu0 %v57
    %981 = vmatpush.msra.mxu0 %v56
    %982 = vmatpush.msra.mxu0 %v55
    %983 = vmatpush.msra.mxu0 %v54
    %984 = vmatmul.f32.gmra.mxu0 %v966
    %v985 = vpop.f32.mrf.mxu0
    %v986 = vadd.f32 %v62, %v985
    %987 = vdwg.mxu0
    %v988 = vxor.u32 %v986, 2147483648
    %v989 = vmul.f32 %v988, 1.442695
    %v990 = vpow.pop %v989
    %v991 = vadd.f32 %v990, 1.0
    %v992 = vrcp.pop %v991
    %v993 = vmul.f32 %v991, %v992
    %v994 = vsub.f32 1.0, %v993
    %v995 = vmul.f32 %v992, %v994
    %v996 = vadd.f32 %v992, %v995
    %vm997 = vweird.f32 %v991
    %vm998 = vweird.f32 %v992
    %vm999 = vmor %vm997, %vm998
    %v1000 = vsel %vm999, %v992, %v996
    %v1001 = vand.u32 2147483647, %v991
    %vm1002 = vcmp.eq.f32.partialorder %v1001, 8.507059e+37
    %v1003 = vand.u32 %v991, 2147483648
    %v1004 = vor.u32 1.1754944e-38, %v1003
    %v1005 = vsel %vm1002, %v1004, %v1000
    %v1006 = vmul.f32 1.0, %v1005
    %v1007 = vtanh.pop %v986
    %v1008 = vmul.f32 %v1006, %v885
    %1010 = vrot.lane.b32.xlu0 %v1007, 64
    %v1011 = vpop.permute.xlu0 %1010
    %v1013 = vmul.f32 %v1006, %v1011
    %1015 = vrot.lane.b32.xlu0 %v1013, 32
    %v1016 = vpop.permute.xlu0 %1015
    %v1018 = vadd.f32 %v1008, %v1016
    %v1019 = vtanh.pop %v1018
    %1021 = vrot.lane.b32.xlu0 %v1019, 64
    %v1022 = vpop.permute.xlu0 %1021
    %v1024 = vmul.f32 %v1006, %v1022
    %1026 = vrot.lane.b32.xlu0 %v1024, 32
    %v1027 = vpop.permute.xlu0 %1026
    %1029 = vst.msk [vmem:[#allocation3 + $0x6] sm:$0x1] %vm230, %v1027
    %v1030 = vld [vmem:[#allocation2 + $0x7] sm:$0x1]
    %v1031 = vsel %vm99, %v959, 0
    %1033 = vmatpush.msra.mxu0 0.0
    %1034 = vmatpush.msra.mxu0 0.0
    %1035 = vmatpush.msra.mxu0 0.0
    %1036 = vmatpush.msra.mxu0 0.0
    %1037 = vmatpush.msra.mxu0 0.0
    %1038 = vmatpush.msra.mxu0 0.0
    %1039 = vmatpush.msra.mxu0 0.0
    %1040 = vmatpush.msra.mxu0 0.0
    %1041 = vmatpush.msra.mxu0 0.0
    %1042 = vmatpush.msra.mxu0 0.0
    %1043 = vmatpush.msra.mxu0 0.0
    %1044 = vmatpush.msra.mxu0 0.0
    %1045 = vmatpush.msra.mxu0 %v53
    %1046 = vmatpush.msra.mxu0 %v52
    %1047 = vmatpush.msra.mxu0 %v51
    %1048 = vmatpush.msra.mxu0 %v50
    %1049 = vmatmul.f32.gmra.mxu0 %v1031
    %v1050 = vpop.f32.mrf.mxu0
    %v1051 = vadd.f32 %v1030, %v1050
    %1052 = vdwg.mxu0
    %v1053 = vxor.u32 %v1051, 2147483648
    %v1054 = vmul.f32 %v1053, 1.442695
    %v1055 = vpow.pop %v1054
    %v1056 = vadd.f32 %v1055, 1.0
    %v1057 = vrcp.pop %v1056
    %v1058 = vmul.f32 %v1056, %v1057
    %v1059 = vsub.f32 1.0, %v1058
    %v1060 = vmul.f32 %v1057, %v1059
    %v1061 = vadd.f32 %v1057, %v1060
    %vm1062 = vweird.f32 %v1056
    %vm1063 = vweird.f32 %v1057
    %vm1064 = vmor %vm1062, %vm1063
    %v1065 = vsel %vm1064, %v1057, %v1061
    %v1066 = vand.u32 2147483647, %v1056
    %vm1067 = vcmp.eq.f32.partialorder %v1066, 8.507059e+37
    %v1068 = vand.u32 %v1056, 2147483648
    %v1069 = vor.u32 1.1754944e-38, %v1068
    %v1070 = vsel %vm1067, %v1069, %v1065
    %v1071 = vmul.f32 1.0, %v1070
    %v1072 = vtanh.pop %v1051
    %v1073 = vmul.f32 %v1071, %v950
    %1075 = vrot.lane.b32.xlu0 %v1072, 64
    %v1076 = vpop.permute.xlu0 %1075
    %v1078 = vmul.f32 %v1071, %v1076
    %1080 = vrot.lane.b32.xlu0 %v1078, 32
    %v1081 = vpop.permute.xlu0 %1080
    %v1083 = vadd.f32 %v1073, %v1081
    %v1084 = vtanh.pop %v1083
    %1086 = vrot.lane.b32.xlu0 %v1084, 64
    %v1087 = vpop.permute.xlu0 %1086
    %v1089 = vmul.f32 %v1071, %v1087
    %1091 = vrot.lane.b32.xlu0 %v1089, 32
    %v1092 = vpop.permute.xlu0 %1091
    %1094 = vrot.lane.b32.xlu0 %v1024, 64
    %v1095 = vpop.permute.xlu0 %1094
    %v1097 = vsel %vm99, %v1092, %v1095
    %v1099 = vsel %vm165, %v1097, 0
    %1101 = vmatpush.msra.mxu0 0.0
    %1102 = vmatpush.msra.mxu0 0.0
    %1103 = vmatpush.msra.mxu0 0.0
    %1104 = vmatpush.msra.mxu0 0.0
    %1105 = vmatpush.msra.mxu0 0.0
    %1106 = vmatpush.msra.mxu0 0.0
    %1107 = vmatpush.msra.mxu0 0.0
    %1108 = vmatpush.msra.mxu0 0.0
    %1109 = vmatpush.msra.mxu0 %v61
    %1110 = vmatpush.msra.mxu0 %v60
    %1111 = vmatpush.msra.mxu0 %v59
    %1112 = vmatpush.msra.mxu0 %v58
    %1113 = vmatpush.msra.mxu0 %v57
    %1114 = vmatpush.msra.mxu0 %v56
    %1115 = vmatpush.msra.mxu0 %v55
    %1116 = vmatpush.msra.mxu0 %v54
    %1117 = vmatmul.f32.gmra.mxu0 %v1099
    %v1118 = vpop.f32.mrf.mxu0
    %v1119 = vadd.f32 %v62, %v1118
    %1120 = vdwg.mxu0
    %v1121 = vxor.u32 %v1119, 2147483648
    %v1122 = vmul.f32 %v1121, 1.442695
    %v1123 = vpow.pop %v1122
    %v1124 = vadd.f32 %v1123, 1.0
    %v1125 = vrcp.pop %v1124
    %v1126 = vmul.f32 %v1124, %v1125
    %v1127 = vsub.f32 1.0, %v1126
    %v1128 = vmul.f32 %v1125, %v1127
    %v1129 = vadd.f32 %v1125, %v1128
    %vm1130 = vweird.f32 %v1124
    %vm1131 = vweird.f32 %v1125
    %vm1132 = vmor %vm1130, %vm1131
    %v1133 = vsel %vm1132, %v1125, %v1129
    %v1134 = vand.u32 2147483647, %v1124
    %vm1135 = vcmp.eq.f32.partialorder %v1134, 8.507059e+37
    %v1136 = vand.u32 %v1124, 2147483648
    %v1137 = vor.u32 1.1754944e-38, %v1136
    %v1138 = vsel %vm1135, %v1137, %v1133
    %v1139 = vmul.f32 1.0, %v1138
    %v1140 = vtanh.pop %v1119
    %v1141 = vmul.f32 %v1139, %v1018
    %1143 = vrot.lane.b32.xlu0 %v1140, 64
    %v1144 = vpop.permute.xlu0 %1143
    %v1146 = vmul.f32 %v1139, %v1144
    %1148 = vrot.lane.b32.xlu0 %v1146, 32
    %v1149 = vpop.permute.xlu0 %1148
    %v1151 = vadd.f32 %v1141, %v1149
    %v1152 = vtanh.pop %v1151
    %1154 = vrot.lane.b32.xlu0 %v1152, 64
    %v1155 = vpop.permute.xlu0 %1154
    %v1157 = vmul.f32 %v1139, %v1155
    %1159 = vrot.lane.b32.xlu0 %v1157, 32
    %v1160 = vpop.permute.xlu0 %1159
    %1162 = vst.msk [vmem:[#allocation3 + $0x7] sm:$0x1] %vm230, %v1160
    %v1163 = vld [vmem:[#allocation3] sm:$0xff]
    %v1164 = vld [vmem:[%s6] sm:$0xff]
    %v1165 = vld [vmem:[%s6 + $0x8] sm:$0xff]
    %v1166 = vld [vmem:[%s6 + $0x10] sm:$0xff]
    %v1167 = vld [vmem:[%s6 + $0x18] sm:$0xff]
    %v1168 = vld [vmem:[%s7] sm:$0x1]
    %v1170 = vperm.slane %v1168, 0
    %v1173 = vsel %vm99, %v1163, 0
    %1175 = vmatpush.msra.mxu0 0.0
    %1176 = vmatpush.msra.mxu0 0.0
    %1177 = vmatpush.msra.mxu0 0.0
    %1178 = vmatpush.msra.mxu0 0.0
    %1179 = vmatpush.msra.mxu0 0.0
    %1180 = vmatpush.msra.mxu0 0.0
    %1181 = vmatpush.msra.mxu0 0.0
    %1182 = vmatpush.msra.mxu0 0.0
    %1183 = vmatpush.msra.mxu0 0.0
    %1184 = vmatpush.msra.mxu0 0.0
    %1185 = vmatpush.msra.mxu0 0.0
    %1186 = vmatpush.msra.mxu0 0.0
    %1187 = vmatpush.msra.mxu0 %v1167
    %1188 = vmatpush.msra.mxu0 %v1166
    %1189 = vmatpush.msra.mxu0 %v1165
    %1190 = vmatpush.msra.mxu0 %v1164
    %1191 = vmatmul.f32.gmra.mxu0 %v1173
    %v1192 = vpop.f32.mrf.mxu0
    %v1193 = vadd.f32 %v1170, %v1192
    %1194 = vdwg.mxu0
    %1195 = vst.msk [vmem:[%s8] sm:$0xff] %vm69, %v1193
    %1196 = vst.msk [vmem:[#allocation7] sm:$0x1] %vm230, %v1092
    %1197 = vst.msk [vmem:[#allocation7 + $0x1] sm:$0x1] %vm230, %v1160
    %1199 = vrot.lane.b32.xlu0 %v1083, 96
    %v1200 = vpop.permute.xlu0 %1199
    %1202 = vst.msk [vmem:[#allocation8] sm:$0x1] %vm230, %v1200
    %1204 = vrot.lane.b32.xlu0 %v1151, 96
    %v1205 = vpop.permute.xlu0 %1204
    %1207 = vst.msk [vmem:[#allocation8 + $0x1] sm:$0x1] %vm230, %v1205
    // Predicated region
    $region38: #{tpu_custom_call.1} parent=1 // pred_check
      _
    $region39: #{tpu_custom_call.1} parent=1 // pred_check_branch
      %1209 = sbr.rel (0) target = $region41
    $region40: #{tpu_custom_call.1} parent=1 // pred_region
      _
    $region41: #{tpu_custom_call.1} parent=1 // pred_fallthru
      _
    // Predicated region
    $region42: #{tpu_custom_call.1} parent=1 // pred_check
      _
    $region43: #{tpu_custom_call.1} parent=1 // pred_check_branch
      %1211 = sbr.rel (0) target = $region45
    $region44: #{tpu_custom_call.1} parent=1 // pred_region
      %1213 = vsyncadd [#allocation6], 0
      %s1215 = sshll.u32 [#allocation7], 4
      %s1216 = int_to_ptr.vmem [resolvable:$true] %s1215
      %s1217 = sshll.u32 %s9, 4
      %s1218 = int_to_ptr.hbm [resolvable:$true] %s1217
      %1220 = dma.vmem_to_hbm [thread:$0]  %s1216, 32, %s1218, [#allocation6]
    $region45: #{tpu_custom_call.1} parent=1 // pred_fallthru
      _
    // Predicated region
    $region46: #{tpu_custom_call.1} parent=1 // pred_check
      _
    $region47: #{tpu_custom_call.1} parent=1 // pred_check_branch
      %1222 = sbr.rel (0) target = $region49
    $region48: #{tpu_custom_call.1} parent=1 // pred_region
      %1224 = vsyncadd [#allocation9], 0
      %s1226 = sshll.u32 [#allocation8], 4
      %s1227 = int_to_ptr.vmem [resolvable:$true] %s1226
      %s1228 = sshll.u32 %s10, 4
      %s1229 = int_to_ptr.hbm [resolvable:$true] %s1228
      %1231 = dma.vmem_to_hbm [thread:$0]  %s1227, 32, %s1229, [#allocation9]
    $region49: #{tpu_custom_call.1} parent=1 // pred_fallthru
      _
    // Predicated region
    $region50: #{tpu_custom_call.1} parent=1 // pred_check
      _
    $region51: #{tpu_custom_call.1} parent=1 // pred_check_branch
      %1233 = sbr.rel (0) target = $region53
    $region52: #{tpu_custom_call.1} parent=1 // pred_region
      _
    $region53: #{tpu_custom_call.1} parent=1 // pred_fallthru
      _
    // Predicated region
    $region54: #{tpu_custom_call.1} parent=1 // pred_check
      _
    $region55: #{tpu_custom_call.1} parent=1 // pred_check_branch
      %1235 = sbr.rel (0) target = $region57
    $region56: #{tpu_custom_call.1} parent=1 // pred_region
      %1237 = dma.done [#allocation6], 32
    $region57: #{tpu_custom_call.1} parent=1 // pred_fallthru
      _
    // Predicated region
    $region58: #{tpu_custom_call.1} parent=1 // pred_check
      _
    $region59: #{tpu_custom_call.1} parent=1 // pred_check_branch
      %1239 = sbr.rel (0) target = $region61
    $region60: #{tpu_custom_call.1} parent=1 // pred_region
      %1241 = dma.done [#allocation9], 32
    $region61: #{tpu_custom_call.1} parent=1 // pred_fallthru
      _
    %1242 = vsyncpa [#allocation5], 1
    %1243 = vsyncpa [#allocation6], 1
    %1244 = vsyncpa [#allocation9], 1

</llo_original>
